<compile_context>
chip_gen: v7x
topology: tpu7x:2x2x1
jax: 0.10.0
libtpu: 0.0.40
codegen_flags: <defaults>
</compile_context>

<pallas_src>
import math
import functools

import jax
import jax.numpy as jnp
from jax import lax
from jax.experimental import pallas as pl
from jax.experimental.pallas import tpu as pltpu

_VMEM_LIMIT = 48 * 1024 * 1024  # fits under v7x's 64 MiB physical VMEM


def _round_up(x, m):
    return (x + m - 1) // m * m


# --------------------------- Linear: y = x @ W^T + b ---------------------------

def _linear_kernel(x_ref, w_ref, b_ref, o_ref):
    acc = jnp.dot(x_ref[...], w_ref[...], preferred_element_type=jnp.float32)
    acc = acc + b_ref[...]                      # bias add in f32 (free VPU filler)
    o_ref[...] = acc.astype(o_ref.dtype)


def linear(x, w, b, *, tm=256):
    """x: (..., d_in); w: (d_out, d_in) [PyTorch layout]; b: (d_out,)."""
    orig_shape = x.shape
    d_in = orig_shape[-1]
    d_out = w.shape[0]

    x2d = x.reshape(-1, d_in)
    n = x2d.shape[0]

    n_pad = _round_up(n, tm)
    din_pad = _round_up(d_in, 128)
    dout_pad = _round_up(d_out, 128)
    tn = 256 if dout_pad % 256 == 0 else 128

    x_p = jnp.pad(x2d, ((0, n_pad - n), (0, din_pad - d_in)))
    w_p = jnp.pad(w.T, ((0, din_pad - d_in), (0, dout_pad - d_out)))
    b_p = jnp.pad(b.astype(jnp.float32), ((0, dout_pad - d_out),)).reshape(1, dout_pad)

    out = pl.pallas_call(
        _linear_kernel,
        out_shape=jax.ShapeDtypeStruct((n_pad, dout_pad), x2d.dtype),
        grid=(n_pad // tm, dout_pad // tn),
        in_specs=[
            pl.BlockSpec((tm, din_pad), lambda i, j: (i, 0)),   # activations
            pl.BlockSpec((din_pad, tn), lambda i, j: (0, j)),   # W^T column tile
            pl.BlockSpec((1, tn), lambda i, j: (0, j)),         # bias tile (f32)
        ],
        out_specs=pl.BlockSpec((tm, tn), lambda i, j: (i, j)),
        compiler_params=pltpu.CompilerParams(
            dimension_semantics=("parallel", "parallel"),
            vmem_limit_bytes=_VMEM_LIMIT),
    )(x_p, w_p, b_p)

    return out[:n, :d_out].reshape(*orig_shape[:-1], d_out)


# ------------------- Flash-style multi-head attention kernel -------------------

def _mha_kernel(q_ref, k_ref, v_ref, o_ref, m_sc, l_sc, acc_sc, *,
                inv_scale, tq, tk, t_k, causal, need_mask):
    ki = pl.program_id(2)

    @pl.when(ki == 0)
    def _():
        m_sc[...] = jnp.full(m_sc.shape, -jnp.inf, dtype=m_sc.dtype)
        l_sc[...] = jnp.zeros(l_sc.shape, dtype=l_sc.dtype)
        acc_sc[...] = jnp.zeros(acc_sc.shape, dtype=acc_sc.dtype)

    q = q_ref[0]                                  # (tq, dh_pad)
    k = k_ref[0]                                  # (tk, dh_pad)
    s = jnp.dot(q, k.T, preferred_element_type=jnp.float32) * inv_scale

    if need_mask:
        col = ki * tk + lax.broadcasted_iota(jnp.int32, (tq, tk), 1)
        masked = col >= t_k                       # key-padding lanes
        if causal:
            row = pl.program_id(1) * tq + lax.broadcasted_iota(jnp.int32, (tq, tk), 0)
            masked = jnp.logical_or(masked, col > row)
        s = jnp.where(masked, -1e9, s)

    m_prev = m_sc[...]
    m_new = jnp.maximum(m_prev, s.max(axis=-1, keepdims=True))
    alpha = jnp.exp(m_prev - m_new)
    p = jnp.exp(s - m_new)
    l_sc[...] = alpha * l_sc[...] + p.sum(axis=-1, keepdims=True)
    acc_sc[...] = alpha * acc_sc[...] + jnp.dot(
        p.astype(v_ref.dtype), v_ref[0], preferred_element_type=jnp.float32)
    m_sc[...] = m_new

    @pl.when(ki == pl.num_programs(2) - 1)
    def _():
        o_ref[0] = (acc_sc[...] / l_sc[...]).astype(o_ref.dtype)


def attention(q, k, v, *, scale, causal=False, tq=128, tk=128):
    """q: (H, Tq, dh); k: (H, Tk, dh); v: (H, Tk, dv) -> (H, Tq, dv)."""
    H, Tq, dh = q.shape
    _, Tk, dv = v.shape

    tq_pad = _round_up(Tq, tq)
    tk_pad = _round_up(Tk, tk)
    dh_pad = _round_up(dh, 128)
    dv_pad = _round_up(dv, 128)

    q_p = jnp.pad(q, ((0, 0), (0, tq_pad - Tq), (0, dh_pad - dh)))
    k_p = jnp.pad(k, ((0, 0), (0, tk_pad - Tk), (0, dh_pad - dh)))
    v_p = jnp.pad(v, ((0, 0), (0, tk_pad - Tk), (0, dv_pad - dv)))

    kernel = functools.partial(
        _mha_kernel, inv_scale=1.0 / scale, tq=tq, tk=tk, t_k=Tk,
        causal=causal, need_mask=(causal or tk_pad != Tk))

    out = pl.pallas_call(
        kernel,
        out_shape=jax.ShapeDtypeStruct((H, tq_pad, dv_pad), q.dtype),
        grid=(H, tq_pad // tq, tk_pad // tk),
        in_specs=[
            pl.BlockSpec((1, tq, dh_pad), lambda h, qi, ki: (h, qi, 0)),
            pl.BlockSpec((1, tk, dh_pad), lambda h, qi, ki: (h, ki, 0)),
            pl.BlockSpec((1, tk, dv_pad), lambda h, qi, ki: (h, ki, 0)),
        ],
        out_specs=pl.BlockSpec((1, tq, dv_pad), lambda h, qi, ki: (h, qi, 0)),
        scratch_shapes=[
            pltpu.VMEM((tq, 1), jnp.float32),        # running max
            pltpu.VMEM((tq, 1), jnp.float32),        # running denom
            pltpu.VMEM((tq, dv_pad), jnp.float32),   # output accumulator
        ],
        compiler_params=pltpu.CompilerParams(
            dimension_semantics=("parallel", "parallel", "arbitrary"),
            vmem_limit_bytes=_VMEM_LIMIT),
    )(q_p, k_p, v_p)

    return out[:, :Tq, :dv]


# ------------------------------ MultiHead2 forward ------------------------------

def multi_head2(query, key, value, params, *, n_heads, causal=False,
                compute_dtype=jnp.float32):
    """MultiHead2.forward (use_wo=True, eval mode, no mask/weights/feedback)."""
    wq, bq, wk, bk, wv, bv, wo, bo = params
    B, Tq, D = query.shape
    _, Tk, _ = key.shape
    N = n_heads
    dh = D // N
    cd = compute_dtype

    q = linear(query.astype(cd), wq.astype(cd), bq)
    k = linear(key.astype(cd), wk.astype(cd), bk)
    v = linear(value.astype(cd), wv.astype(cd), bv)

    def split_heads(x, T):
        return x.reshape(B, T, N, dh).transpose(0, 2, 1, 3).reshape(B * N, T, dh)

    qh, kh, vh = split_heads(q, Tq), split_heads(k, Tk), split_heads(v, Tk)

    # NOTE: scale is sqrt(d_key) on the FULL model dim, matching the PyTorch module.
    out = attention(qh, kh, vh, scale=math.sqrt(D), causal=(causal and Tq == Tk))

    out = out.reshape(B, N, Tq, dh).transpose(0, 2, 1, 3).reshape(B, Tq, D)
    out = linear(out, wo.astype(cd), bo)
    return out.astype(query.dtype)


def init_multihead2_params(key, d_key, d_value, dtype=jnp.float32):
    """Match the PyTorch Linear init: uniform(-1/sqrt(d_in), +), zero bias."""
    ks = jax.random.split(key, 4)

    def lin(k, d_out, d_in):
        stdv = 1.0 / math.sqrt(d_in)
        return (jax.random.uniform(k, (d_out, d_in), dtype, -stdv, stdv),
                jnp.zeros((d_out,), dtype))

    wq, bq = lin(ks[0], d_key, d_key)
    wk, bk = lin(ks[1], d_key, d_key)
    wv, bv = lin(ks[2], d_value, d_value)
    wo, bo = lin(ks[3], d_key, d_value)
    return (wq, bq, wk, bk, wv, bv, wo, bo)


def reference_multi_head2(query, key, value, params, n_heads, causal=False):
    wq, bq, wk, bk, wv, bv, wo, bo = params
    q = query @ wq.T + bq
    k = key @ wk.T + bk
    v = value @ wv.T + bv
    B, Tq, D = q.shape
    _, Tk, _ = k.shape
    N, dh = n_heads, D // n_heads

    def split(x, T):
        return x.reshape(B, T, N, dh).transpose(0, 2, 1, 3).reshape(B * N, T, dh)

    qh, kh, vh = split(q, Tq), split(k, Tk), split(v, Tk)
    s = jnp.einsum('bqd,bkd->bqk', qh, kh)
    if causal and Tq == Tk:
        s = s - (jnp.triu(jnp.ones((Tq, Tk)), 1) * 1e10)[None]
    p = jax.nn.softmax(s / math.sqrt(D), axis=-1)
    o = jnp.einsum('bqk,bkd->bqd', p, vh)
    o = o.reshape(B, N, Tq, dh).transpose(0, 2, 1, 3).reshape(B, Tq, D)
    return o @ wo.T + bo


if __name__ == "__main__":
    root = jax.random.PRNGKey(0)
    kq, kk, kv, kp = jax.random.split(root, 4)

    B, Tq, Tk, D, N = 2, 8, 8, 32, 4
    query = jax.random.normal(kq, (B, Tq, D), jnp.float32)
    key_in = jax.random.normal(kk, (B, Tk, D), jnp.float32)
    value = jax.random.normal(kv, (B, Tk, D), jnp.float32)
    params = init_multihead2_params(kp, d_key=D, d_value=D)

    # f32 path (bit-accurate vs the PyTorch-style reference)
    fwd = jax.jit(functools.partial(multi_head2, n_heads=N, causal=False))
    y = jax.block_until_ready(fwd(query, key_in, value, params))
    ref = reference_multi_head2(query, key_in, value, params, N)
    assert y.shape == (B, Tq, D)
    assert jnp.allclose(y, ref, atol=1e-4, rtol=1e-4), float(jnp.max(jnp.abs(y - ref)))

    # bf16 operand path (recommended on v6e/v7x; f32 accumulation inside kernels)
    fwd_bf16 = jax.jit(functools.partial(
        multi_head2, n_heads=N, causal=False, compute_dtype=jnp.bfloat16))
    y_bf16 = jax.block_until_ready(fwd_bf16(query, key_in, value, params))
    assert y_bf16.shape == (B, Tq, D)
    assert bool(jnp.all(jnp.isfinite(y_bf16)))
    assert float(jnp.max(jnp.abs(y_bf16 - ref))) < 0.25

    print("KERNEL_OK")
</pallas_src>

<mosaic_0001>
module attributes {stable_mosaic.version = 11 : i64} {
  func.func @_linear_kernel(%arg0: i32, %arg1: i32, %arg2: memref<256x128xf32, #tpu.memory_space<vmem>>, %arg3: memref<128x128xf32, #tpu.memory_space<vmem>>, %arg4: memref<1x128xf32, #tpu.memory_space<vmem>>, %arg5: memref<256x128xf32, #tpu.memory_space<vmem>>) attributes {dimension_semantics = [#tpu.dimension_semantics<parallel>, #tpu.dimension_semantics<parallel>], iteration_bounds = array<i64: 1, 1>, scalar_prefetch = 0 : i64, scratch_operands = 0 : i64, tpu.core_type = #tpu.core_type<tc>, window_params = [{transform_indices = @transform_0, window_bounds = array<i64: 256, 128>}, {transform_indices = @transform_1, window_bounds = array<i64: 128, 128>}, {transform_indices = @transform_2, window_bounds = array<i64: 1, 128>}, {transform_indices = @transform_3, window_bounds = array<i64: 256, 128>}]} {
    %c0 = arith.constant 0 : index
    %c0_0 = arith.constant 0 : index
    %0 = vector.load %arg2[%c0, %c0_0] : memref<256x128xf32, #tpu.memory_space<vmem>>, vector<256x128xf32>
    %c0_1 = arith.constant 0 : index
    %c0_2 = arith.constant 0 : index
    %1 = vector.load %arg3[%c0_1, %c0_2] : memref<128x128xf32, #tpu.memory_space<vmem>>, vector<128x128xf32>
    %cst = arith.constant dense<0.000000e+00> : vector<256x128xf32>
    %2 = tpu.matmul %0, %1, %cst {dimension_numbers = #tpu.dot_dimension_numbers<[1], [0], [0], [1], [0, 0, 1, 1], [], []>} : vector<256x128xf32>, vector<128x128xf32>, vector<256x128xf32> -> vector<256x128xf32>
    %c0_3 = arith.constant 0 : index
    %c0_4 = arith.constant 0 : index
    %3 = vector.load %arg4[%c0_3, %c0_4] : memref<1x128xf32, #tpu.memory_space<vmem>>, vector<1x128xf32>
    %4 = vector.broadcast %3 : vector<1x128xf32> to vector<256x128xf32>
    %5 = arith.addf %2, %4 : vector<256x128xf32>
    %c0_5 = arith.constant 0 : index
    %c0_6 = arith.constant 0 : index
    %6 = vector.load %arg5[%c0_5, %c0_6] : memref<256x128xf32, #tpu.memory_space<vmem>>, vector<256x128xf32>
    tpu.vector_store %arg5[%c0_5, %c0_6], %5 {strides = array<i32>} : memref<256x128xf32, #tpu.memory_space<vmem>>, vector<256x128xf32>,
    return
  }
  func.func @transform_0(%arg0: i32, %arg1: i32) -> (i32, i32) {
    %c0_i32 = arith.constant 0 : i32
    %c0_i32_0 = arith.constant 0 : i32
    return %arg0, %c0_i32 : i32, i32
  }
  func.func @transform_1(%arg0: i32, %arg1: i32) -> (i32, i32) {
    %c0_i32 = arith.constant 0 : i32
    %c0_i32_0 = arith.constant 0 : i32
    return %c0_i32, %arg1 : i32, i32
  }
  func.func @transform_2(%arg0: i32, %arg1: i32) -> (i32, i32) {
    %c0_i32 = arith.constant 0 : i32
    %c0_i32_0 = arith.constant 0 : i32
    return %c0_i32, %arg1 : i32, i32
  }
  func.func @transform_3(%arg0: i32, %arg1: i32) -> (i32, i32) {
    %c0_i32 = arith.constant 0 : i32
    return %arg0, %arg1 : i32, i32
  }
}

module attributes {stable_mosaic.version = 11 : i64} {
  func.func @_mha_kernel(%arg0: i32, %arg1: i32, %arg2: i32, %arg3: memref<1x128x128xf32, #tpu.memory_space<vmem>>, %arg4: memref<1x128x128xf32, #tpu.memory_space<vmem>>, %arg5: memref<1x128x128xf32, #tpu.memory_space<vmem>>, %arg6: memref<1x128x128xf32, #tpu.memory_space<vmem>>, %arg7: memref<128x1xf32, #tpu.memory_space<vmem>>, %arg8: memref<128x1xf32, #tpu.memory_space<vmem>>, %arg9: memref<128x128xf32, #tpu.memory_space<vmem>>) attributes {dimension_semantics = [#tpu.dimension_semantics<parallel>, #tpu.dimension_semantics<parallel>, #tpu.dimension_semantics<arbitrary>], iteration_bounds = array<i64: 8, 1, 1>, scalar_prefetch = 0 : i64, scratch_operands = 3 : i64, tpu.core_type = #tpu.core_type<tc>, window_params = [{transform_indices = @transform_0, window_bounds = array<i64: 1, 128, 128>}, {transform_indices = @transform_1, window_bounds = array<i64: 1, 128, 128>}, {transform_indices = @transform_2, window_bounds = array<i64: 1, 128, 128>}, {transform_indices = @transform_3, window_bounds = array<i64: 1, 128, 128>}]} {
    %c0_i32 = arith.constant 0 : i32
    %0 = arith.cmpi eq, %arg2, %c0_i32 : i32
    %1 = arith.extui %0 : i1 to i32
    %c0_i32_0 = arith.constant 0 : i32
    %2 = arith.cmpi ne, %1, %c0_i32_0 : i32
    scf.if %2 {
      %cst_28 = arith.constant 0xFF800000 : f32
      %46 = vector.broadcast %cst_28 : f32 to vector<128x1xf32>
      %c0_29 = arith.constant 0 : index
      %c0_30 = arith.constant 0 : index
      %47 = vector.load %arg7[%c0_29, %c0_30] : memref<128x1xf32, #tpu.memory_space<vmem>>, vector<128x1xf32>
      tpu.vector_store %arg7[%c0_29, %c0_30], %46 {strides = array<i32>} : memref<128x1xf32, #tpu.memory_space<vmem>>, vector<128x1xf32>,
      %cst_31 = arith.constant 0.000000e+00 : f32
      %48 = vector.broadcast %cst_31 : f32 to vector<128x1xf32>
      %c0_32 = arith.constant 0 : index
      %c0_33 = arith.constant 0 : index
      %49 = vector.load %arg8[%c0_32, %c0_33] : memref<128x1xf32, #tpu.memory_space<vmem>>, vector<128x1xf32>
      tpu.vector_store %arg8[%c0_32, %c0_33], %48 {strides = array<i32>} : memref<128x1xf32, #tpu.memory_space<vmem>>, vector<128x1xf32>,
      %cst_34 = arith.constant 0.000000e+00 : f32
      %50 = vector.broadcast %cst_34 : f32 to vector<128x128xf32>
      %c0_35 = arith.constant 0 : index
      %c0_36 = arith.constant 0 : index
      %51 = vector.load %arg9[%c0_35, %c0_36] : memref<128x128xf32, #tpu.memory_space<vmem>>, vector<128x128xf32>
      tpu.vector_store %arg9[%c0_35, %c0_36], %50 {strides = array<i32>} : memref<128x128xf32, #tpu.memory_space<vmem>>, vector<128x128xf32>,
    } else {
    }
    %c0 = arith.constant 0 : index
    %c0_1 = arith.constant 0 : index
    %c0_2 = arith.constant 0 : index
    %3 = vector.load %arg3[%c0, %c0_1, %c0_2] : memref<1x128x128xf32, #tpu.memory_space<vmem>>, vector<1x128x128xf32>
    %4 = vector.shape_cast %3 : vector<1x128x128xf32> to vector<128x128xf32>
    %c0_3 = arith.constant 0 : index
    %c0_4 = arith.constant 0 : index
    %c0_5 = arith.constant 0 : index
    %5 = vector.load %arg4[%c0_3, %c0_4, %c0_5] : memref<1x128x128xf32, #tpu.memory_space<vmem>>, vector<1x128x128xf32>
    %6 = vector.shape_cast %5 : vector<1x128x128xf32> to vector<128x128xf32>
    %7 = tpu.transpose %6, [1, 0] : vector<128x128xf32> -> vector<128x128xf32>
    %cst = arith.constant dense<0.000000e+00> : vector<128x128xf32>
    %8 = tpu.matmul %4, %7, %cst {dimension_numbers = #tpu.dot_dimension_numbers<[1], [0], [0], [1], [0, 0, 1, 1], [], []>} : vector<128x128xf32>, vector<128x128xf32>, vector<128x128xf32> -> vector<128x128xf32>
    %cst_6 = arith.constant 0.176776692 : f32
    %9 = vector.broadcast %cst_6 : f32 to vector<128x128xf32>
    %10 = arith.mulf %8, %9 : vector<128x128xf32>
    %c128_i32 = arith.constant 128 : i32
    %11 = arith.muli %arg2, %c128_i32 : i32
    %12 = tpu.iota {dimensions = array<i32: 1>} : vector<128x128xi32>
    %13 = vector.broadcast %11 : i32 to vector<128x128xi32>
    %14 = arith.addi %13, %12 : vector<128x128xi32>
    %c8_i32 = arith.constant 8 : i32
    %15 = vector.broadcast %c8_i32 : i32 to vector<128x128xi32>
    %16 = arith.cmpi sge, %14, %15 : vector<128x128xi32>
    %cst_7 = arith.constant -1.000000e+09 : f32
    %17 = vector.broadcast %cst_7 : f32 to vector<128x128xf32>
    %18 = arith.select %16, %17, %10 : vector<128x128xi1>, vector<128x128xf32>
    %c0_8 = arith.constant 0 : index
    %c0_9 = arith.constant 0 : index
    %19 = vector.load %arg7[%c0_8, %c0_9] : memref<128x1xf32, #tpu.memory_space<vmem>>, vector<128x1xf32>
    %cst_10 = arith.constant dense<0xFF800000> : vector<128xf32>
    %20 = vector.multi_reduction <maximumf>, %18, %cst_10 [1] : vector<128x128xf32> to vector<128xf32>
    %21 = vector.shape_cast %20 : vector<128xf32> to vector<128x1xf32>
    %22 = arith.maximumf %19, %21 : vector<128x1xf32>
    %23 = arith.subf %19, %22 : vector<128x1xf32>
    %24 = math.exp %23 : vector<128x1xf32>
    %25 = vector.broadcast %22 : vector<128x1xf32> to vector<128x128xf32>
    %26 = arith.subf %18, %25 : vector<128x128xf32>
    %27 = math.exp %26 : vector<128x128xf32>
    %c0_11 = arith.constant 0 : index
    %c0_12 = arith.constant 0 : index
    %28 = vector.load %arg8[%c0_11, %c0_12] : memref<128x1xf32, #tpu.memory_space<vmem>>, vector<128x1xf32>
    %29 = arith.mulf %24, %28 : vector<128x1xf32>
    %cst_13 = arith.constant dense<0.000000e+00> : vector<128xf32>
    %30 = vector.multi_reduction <add>, %27, %cst_13 [1] : vector<128x128xf32> to vector<128xf32>
    %31 = vector.shape_cast %30 : vector<128xf32> to vector<128x1xf32>
    %32 = arith.addf %29, %31 : vector<128x1xf32>
    %c0_14 = arith.constant 0 : index
    %c0_15 = arith.constant 0 : index
    %33 = vector.load %arg8[%c0_14, %c0_15] : memref<128x1xf32, #tpu.memory_space<vmem>>, vector<128x1xf32>
    tpu.vector_store %arg8[%c0_14, %c0_15], %32 {strides = array<i32>} : memref<128x1xf32, #tpu.memory_space<vmem>>, vector<128x1xf32>,
    %c0_16 = arith.constant 0 : index
    %c0_17 = arith.constant 0 : index
    %34 = vector.load %arg9[%c0_16, %c0_17] : memref<128x128xf32, #tpu.memory_space<vmem>>, vector<128x128xf32>
    %35 = vector.broadcast %24 : vector<128x1xf32> to vector<128x128xf32>
    %36 = arith.mulf %35, %34 : vector<128x128xf32>
    %c0_18 = arith.constant 0 : index
    %c0_19 = arith.constant 0 : index
    %c0_20 = arith.constant 0 : index
    %37 = vector.load %arg5[%c0_18, %c0_19, %c0_20] : memref<1x128x128xf32, #tpu.memory_space<vmem>>, vector<1x128x128xf32>
    %38 = vector.shape_cast %37 : vector<1x128x128xf32> to vector<128x128xf32>
    %cst_21 = arith.constant dense<0.000000e+00> : vector<128x128xf32>
    %39 = tpu.matmul %27, %38, %cst_21 {dimension_numbers = #tpu.dot_dimension_numbers<[1], [0], [0], [1], [0, 0, 1, 1], [], []>} : vector<128x128xf32>, vector<128x128xf32>, vector<128x128xf32> -> vector<128x128xf32>
    %40 = arith.addf %36, %39 : vector<128x128xf32>
    %c0_22 = arith.constant 0 : index
    %c0_23 = arith.constant 0 : index
    %41 = vector.load %arg9[%c0_22, %c0_23] : memref<128x128xf32, #tpu.memory_space<vmem>>, vector<128x128xf32>
    tpu.vector_store %arg9[%c0_22, %c0_23], %40 {strides = array<i32>} : memref<128x128xf32, #tpu.memory_space<vmem>>, vector<128x128xf32>,
    %c0_24 = arith.constant 0 : index
    %c0_25 = arith.constant 0 : index
    %42 = vector.load %arg7[%c0_24, %c0_25] : memref<128x1xf32, #tpu.memory_space<vmem>>, vector<128x1xf32>
    tpu.vector_store %arg7[%c0_24, %c0_25], %22 {strides = array<i32>} : memref<128x1xf32, #tpu.memory_space<vmem>>, vector<128x1xf32>,
    %c0_i32_26 = arith.constant 0 : i32
    %43 = arith.cmpi eq, %arg2, %c0_i32_26 : i32
    %44 = arith.extui %43 : i1 to i32
    %c0_i32_27 = arith.constant 0 : i32
    %45 = arith.cmpi ne, %44, %c0_i32_27 : i32
    scf.if %45 {
      %c0_28 = arith.constant 0 : index
      %c0_29 = arith.constant 0 : index
      %46 = vector.load %arg9[%c0_28, %c0_29] : memref<128x128xf32, #tpu.memory_space<vmem>>, vector<128x128xf32>
      %c0_30 = arith.constant 0 : index
      %c0_31 = arith.constant 0 : index
      %47 = vector.load %arg8[%c0_30, %c0_31] : memref<128x1xf32, #tpu.memory_space<vmem>>, vector<128x1xf32>
      %48 = vector.broadcast %47 : vector<128x1xf32> to vector<128x128xf32>
      %49 = arith.divf %46, %48 : vector<128x128xf32>
      %c0_32 = arith.constant 0 : index
      %c0_33 = arith.constant 0 : index
      %c0_34 = arith.constant 0 : index
      %50 = vector.load %arg6[%c0_32, %c0_33, %c0_34] : memref<1x128x128xf32, #tpu.memory_space<vmem>>, vector<1x128x128xf32>
      %51 = vector.shape_cast %50 : vector<1x128x128xf32> to vector<128x128xf32>
      %52 = vector.shape_cast %49 : vector<128x128xf32> to vector<1x128x128xf32>
      tpu.vector_store %arg6[%c0_32, %c0_33, %c0_34], %52 {strides = array<i32>} : memref<1x128x128xf32, #tpu.memory_space<vmem>>, vector<1x128x128xf32>,
    } else {
    }
    return
  }
  func.func @transform_0(%arg0: i32, %arg1: i32, %arg2: i32) -> (i32, i32, i32) {
    %c0_i32 = arith.constant 0 : i32
    %c0_i32_0 = arith.constant 0 : i32
    return %arg0, %arg1, %c0_i32 : i32, i32, i32
  }
  func.func @transform_1(%arg0: i32, %arg1: i32, %arg2: i32) -> (i32, i32, i32) {
    %c0_i32 = arith.constant 0 : i32
    %c0_i32_0 = arith.constant 0 : i32
    return %arg0, %arg2, %c0_i32 : i32, i32, i32
  }
  func.func @transform_2(%arg0: i32, %arg1: i32, %arg2: i32) -> (i32, i32, i32) {
    %c0_i32 = arith.constant 0 : i32
    %c0_i32_0 = arith.constant 0 : i32
    return %arg0, %arg2, %c0_i32 : i32, i32, i32
  }
  func.func @transform_3(%arg0: i32, %arg1: i32, %arg2: i32) -> (i32, i32, i32) {
    %c0_i32 = arith.constant 0 : i32
    %c0_i32_0 = arith.constant 0 : i32
    return %arg0, %arg1, %c0_i32 : i32, i32, i32
  }
}

</mosaic_0001>

<llo_original>
// kernel: multi_head2.6
$region0: #{multi_head2.6}
  #allocation0 [shape = 'u32[]', space=smem, size = 0x4, offset = 0x4, fixed_abs, tag = 'smem constant byte address 0x4 - core index']
  #allocation1 [shape = 'u32[144,128]{1,0:T(1,128)}', space=vmem, size = 0x12000, scoped, tag = 'internal scratch']
  %s0 = inlined_call_operand.vmem [shape: f32[256,128], index: 0, kind: input, shape index: {}]
  %s1 = inlined_call_operand.vmem [shape: f32[128,128], index: 1, kind: input, shape index: {}]
  %s2 = inlined_call_operand.vmem [shape: f32[1,128], index: 2, kind: input, shape index: {}]
  %s3 = inlined_call_operand.vmem [shape: f32[256,128], index: 3, kind: output, shape index: {}]
  %s4 = sld [smem:[#allocation0]]
  $region22: #{multi_head2.6} parent=0
    _
  %s6 = ssub.s32 1, %s4
  %s7 = scalar_select 0, %s6, %s4
  // Predicated region
  $region2: #{multi_head2.6} parent=0 // pred_check
    _
  $region3: #{multi_head2.6} parent=0 // pred_check_branch
    %9 = sbr.rel (0) target = $region5
  $region4: #{multi_head2.6} parent=0 // pred_region
    _
  $region5: #{multi_head2.6} parent=0 // pred_fallthru
    _
  // Predicated region
  $region6: #{multi_head2.6} parent=0 // pred_check
    _
  $region7: #{multi_head2.6} parent=0 // pred_check_branch
    %11 = sbr.rel (0) target = $region9
  $region8: #{multi_head2.6} parent=0 // pred_region
    _
  $region9: #{multi_head2.6} parent=0 // pred_fallthru
    _
  // Predicated region
  $region10: #{multi_head2.6} parent=0 // pred_check
    _
  $region11: #{multi_head2.6} parent=0 // pred_check_branch
    %13 = sbr.rel (0) target = $region13
  $region12: #{multi_head2.6} parent=0 // pred_region
    _
  $region13: #{multi_head2.6} parent=0 // pred_fallthru
    _
  %v14 = vld [vmem:[%s0] sm:$0xff]
  %v15 = vld [vmem:[%s0 + $0x8] sm:$0xff]
  %v16 = vld [vmem:[%s0 + $0x10] sm:$0xff]
  %v17 = vld [vmem:[%s0 + $0x18] sm:$0xff]
  %v18 = vld [vmem:[%s0 + $0x20] sm:$0xff]
  %v19 = vld [vmem:[%s0 + $0x28] sm:$0xff]
  %v20 = vld [vmem:[%s0 + $0x30] sm:$0xff]
  %v21 = vld [vmem:[%s0 + $0x38] sm:$0xff]
  %v22 = vld [vmem:[%s0 + $0x40] sm:$0xff]
  %v23 = vld [vmem:[%s0 + $0x48] sm:$0xff]
  %v24 = vld [vmem:[%s0 + $0x50] sm:$0xff]
  %v25 = vld [vmem:[%s0 + $0x58] sm:$0xff]
  %v26 = vld [vmem:[%s0 + $0x60] sm:$0xff]
  %v27 = vld [vmem:[%s0 + $0x68] sm:$0xff]
  %v28 = vld [vmem:[%s0 + $0x70] sm:$0xff]
  %v29 = vld [vmem:[%s0 + $0x78] sm:$0xff]
  %v30 = vld [vmem:[%s0 + $0x80] sm:$0xff]
  %v31 = vld [vmem:[%s0 + $0x88] sm:$0xff]
  %v32 = vld [vmem:[%s0 + $0x90] sm:$0xff]
  %v33 = vld [vmem:[%s0 + $0x98] sm:$0xff]
  %v34 = vld [vmem:[%s0 + $0xa0] sm:$0xff]
  %v35 = vld [vmem:[%s0 + $0xa8] sm:$0xff]
  %v36 = vld [vmem:[%s0 + $0xb0] sm:$0xff]
  %v37 = vld [vmem:[%s0 + $0xb8] sm:$0xff]
  %v38 = vld [vmem:[%s0 + $0xc0] sm:$0xff]
  %v39 = vld [vmem:[%s0 + $0xc8] sm:$0xff]
  %v40 = vld [vmem:[%s0 + $0xd0] sm:$0xff]
  %v41 = vld [vmem:[%s0 + $0xd8] sm:$0xff]
  %v42 = vld [vmem:[%s0 + $0xe0] sm:$0xff]
  %v43 = vld [vmem:[%s0 + $0xe8] sm:$0xff]
  %v44 = vld [vmem:[%s0 + $0xf0] sm:$0xff]
  %v45 = vld [vmem:[%s0 + $0xf8] sm:$0xff]
  %v46 = vld [vmem:[%s1] sm:$0xff]
  %v47 = vld [vmem:[%s1 + $0x8] sm:$0xff]
  %v48 = vld [vmem:[%s1 + $0x10] sm:$0xff]
  %v49 = vld [vmem:[%s1 + $0x18] sm:$0xff]
  %v50 = vld [vmem:[%s1 + $0x20] sm:$0xff]
  %v51 = vld [vmem:[%s1 + $0x28] sm:$0xff]
  %v52 = vld [vmem:[%s1 + $0x30] sm:$0xff]
  %v53 = vld [vmem:[%s1 + $0x38] sm:$0xff]
  %v54 = vld [vmem:[%s1 + $0x40] sm:$0xff]
  %v55 = vld [vmem:[%s1 + $0x48] sm:$0xff]
  %v56 = vld [vmem:[%s1 + $0x50] sm:$0xff]
  %v57 = vld [vmem:[%s1 + $0x58] sm:$0xff]
  %v58 = vld [vmem:[%s1 + $0x60] sm:$0xff]
  %v59 = vld [vmem:[%s1 + $0x68] sm:$0xff]
  %v60 = vld [vmem:[%s1 + $0x70] sm:$0xff]
  %v61 = vld [vmem:[%s1 + $0x78] sm:$0xff]
  %v62 = vld [vmem:[%s2] sm:$0x1]
  %v64 = vlaneseq
  %v65 = vshrl.u32 %v64, 7
  %v66 = vsub.s32 0, %v65
  %v67 = vrot.slane %v62, %v66
  %69 = vmatprep.subr.mxu0 0.0
  %70 = vmatpush1.msra.mxu0 %v46
  %71 = vmatprep.subr.mxu0 0.0
  %72 = vmatpush1.msra.mxu0 %v47
  %73 = vmatprep.subr.mxu0 0.0
  %74 = vmatpush1.msra.mxu0 %v48
  %75 = vmatprep.subr.mxu0 0.0
  %76 = vmatpush1.msra.mxu0 %v49
  %77 = vmatprep.subr.mxu0 0.0
  %78 = vmatpush1.msra.mxu0 %v50
  %79 = vmatprep.subr.mxu0 0.0
  %80 = vmatpush1.msra.mxu0 %v51
  %81 = vmatprep.subr.mxu0 0.0
  %82 = vmatpush1.msra.mxu0 %v52
  %83 = vmatprep.subr.mxu0 0.0
  %84 = vmatpush1.msra.mxu0 %v53
  %85 = vmatprep.subr.mxu0 0.0
  %86 = vmatpush1.msra.mxu0 %v54
  %87 = vmatprep.subr.mxu0 0.0
  %88 = vmatpush1.msra.mxu0 %v55
  %89 = vmatprep.subr.mxu0 0.0
  %90 = vmatpush1.msra.mxu0 %v56
  %91 = vmatprep.subr.mxu0 0.0
  %92 = vmatpush1.msra.mxu0 %v57
  %93 = vmatprep.subr.mxu0 0.0
  %94 = vmatpush1.msra.mxu0 %v58
  %95 = vmatprep.subr.mxu0 0.0
  %96 = vmatpush1.msra.mxu0 %v59
  %97 = vmatprep.subr.mxu0 0.0
  %98 = vmatpush1.msra.mxu0 %v60
  %99 = vmatprep.subr.mxu0 0.0
  %100 = vmatpush1.msra.mxu0 %v61
  %101 = vmatprep.subr.mxu0 0.0
  %102 = vmatpush1.msra.mxu0 0.0
  %103 = vmatprep.subr.mxu0 0.0
  %104 = vmatpush1.msra.mxu0 0.0
  %105 = vmatprep.subr.mxu0 0.0
  %106 = vmatpush1.msra.mxu0 0.0
  %107 = vmatprep.subr.mxu0 0.0
  %108 = vmatpush1.msra.mxu0 0.0
  %109 = vmatprep.subr.mxu0 0.0
  %110 = vmatpush1.msra.mxu0 0.0
  %111 = vmatprep.subr.mxu0 0.0
  %112 = vmatpush1.msra.mxu0 0.0
  %113 = vmatprep.subr.mxu0 0.0
  %114 = vmatpush1.msra.mxu0 0.0
  %115 = vmatprep.subr.mxu0 0.0
  %116 = vmatpush1.msra.mxu0 0.0
  %117 = vmatprep.subr.mxu0 0.0
  %118 = vmatpush1.msra.mxu0 0.0
  %119 = vmatprep.subr.mxu0 0.0
  %120 = vmatpush1.msra.mxu0 0.0
  %121 = vmatprep.subr.mxu0 0.0
  %122 = vmatpush1.msra.mxu0 0.0
  %123 = vmatprep.subr.mxu0 0.0
  %124 = vmatpush1.msra.mxu0 0.0
  %125 = vmatprep.subr.mxu0 0.0
  %126 = vmatpush1.msra.mxu0 0.0
  %127 = vmatprep.subr.mxu0 0.0
  %128 = vmatpush1.msra.mxu0 0.0
  %129 = vmatprep.subr.mxu0 0.0
  %130 = vmatpush1.msra.mxu0 0.0
  %131 = vmatprep.subr.mxu0 0.0
  %132 = vmatpush1.msra.mxu0 0.0
  %133 = vmatprep.mubr.f32.mxu0 0.0
  %134 = vmatmul.mubr.f32.gmra.mrb[0].mxu0 %v14
  %v135 = vpop.f32.mrb[0].mxu0
  %v136 = vadd.f32 %v67, %v135
  %v137 = vpop.f32.mrb[0].mxu0
  %138 = vmatprep.mubr.f32.mxu0 0.0
  %139 = vmatmul.mubr.f32.gmra.mrb[0].mxu0 %v15
  %v140 = vpop.f32.mrb[0].mxu0
  %v141 = vadd.f32 %v67, %v140
  %v142 = vpop.f32.mrb[0].mxu0
  %143 = vmatprep.mubr.f32.mxu0 0.0
  %144 = vmatmul.mubr.f32.gmra.mrb[0].mxu0 %v16
  %v145 = vpop.f32.mrb[0].mxu0
  %v146 = vadd.f32 %v67, %v145
  %v147 = vpop.f32.mrb[0].mxu0
  %148 = vmatprep.mubr.f32.mxu0 0.0
  %149 = vmatmul.mubr.f32.gmra.mrb[0].mxu0 %v17
  %v150 = vpop.f32.mrb[0].mxu0
  %v151 = vadd.f32 %v67, %v150
  %v152 = vpop.f32.mrb[0].mxu0
  %153 = vmatprep.mubr.f32.mxu0 0.0
  %154 = vmatmul.mubr.f32.gmra.mrb[0].mxu0 %v18
  %v155 = vpop.f32.mrb[0].mxu0
  %v156 = vadd.f32 %v67, %v155
  %v157 = vpop.f32.mrb[0].mxu0
  %158 = vmatprep.mubr.f32.mxu0 0.0
  %159 = vmatmul.mubr.f32.gmra.mrb[0].mxu0 %v19
  %v160 = vpop.f32.mrb[0].mxu0
  %v161 = vadd.f32 %v67, %v160
  %v162 = vpop.f32.mrb[0].mxu0
  %163 = vmatprep.mubr.f32.mxu0 0.0
  %164 = vmatmul.mubr.f32.gmra.mrb[0].mxu0 %v20
  %v165 = vpop.f32.mrb[0].mxu0
  %v166 = vadd.f32 %v67, %v165
  %v167 = vpop.f32.mrb[0].mxu0
  %168 = vmatprep.mubr.f32.mxu0 0.0
  %169 = vmatmul.mubr.f32.gmra.mrb[0].mxu0 %v21
  %v170 = vpop.f32.mrb[0].mxu0
  %v171 = vadd.f32 %v67, %v170
  %v172 = vpop.f32.mrb[0].mxu0
  %173 = vmatprep.mubr.f32.mxu0 0.0
  %174 = vmatmul.mubr.f32.gmra.mrb[0].mxu0 %v22
  %v175 = vpop.f32.mrb[0].mxu0
  %v176 = vadd.f32 %v67, %v175
  %v177 = vpop.f32.mrb[0].mxu0
  %178 = vmatprep.mubr.f32.mxu0 0.0
  %179 = vmatmul.mubr.f32.gmra.mrb[0].mxu0 %v23
  %v180 = vpop.f32.mrb[0].mxu0
  %v181 = vadd.f32 %v67, %v180
  %v182 = vpop.f32.mrb[0].mxu0
  %183 = vmatprep.mubr.f32.mxu0 0.0
  %184 = vmatmul.mubr.f32.gmra.mrb[0].mxu0 %v24
  %v185 = vpop.f32.mrb[0].mxu0
  %v186 = vadd.f32 %v67, %v185
  %v187 = vpop.f32.mrb[0].mxu0
  %188 = vmatprep.mubr.f32.mxu0 0.0
  %189 = vmatmul.mubr.f32.gmra.mrb[0].mxu0 %v25
  %v190 = vpop.f32.mrb[0].mxu0
  %v191 = vadd.f32 %v67, %v190
  %v192 = vpop.f32.mrb[0].mxu0
  %193 = vmatprep.mubr.f32.mxu0 0.0
  %194 = vmatmul.mubr.f32.gmra.mrb[0].mxu0 %v26
  %v195 = vpop.f32.mrb[0].mxu0
  %v196 = vadd.f32 %v67, %v195
  %v197 = vpop.f32.mrb[0].mxu0
  %198 = vmatprep.mubr.f32.mxu0 0.0
  %199 = vmatmul.mubr.f32.gmra.mrb[0].mxu0 %v27
  %v200 = vpop.f32.mrb[0].mxu0
  %v201 = vadd.f32 %v67, %v200
  %v202 = vpop.f32.mrb[0].mxu0
  %203 = vmatprep.mubr.f32.mxu0 0.0
  %204 = vmatmul.mubr.f32.gmra.mrb[0].mxu0 %v28
  %v205 = vpop.f32.mrb[0].mxu0
  %v206 = vadd.f32 %v67, %v205
  %v207 = vpop.f32.mrb[0].mxu0
  %208 = vmatprep.mubr.f32.mxu0 0.0
  %209 = vmatmul.mubr.f32.gmra.mrb[0].mxu0 %v29
  %v210 = vpop.f32.mrb[0].mxu0
  %v211 = vadd.f32 %v67, %v210
  %v212 = vpop.f32.mrb[0].mxu0
  %213 = vmatprep.mubr.f32.mxu0 0.0
  %214 = vmatmul.mubr.f32.gmra.mrb[0].mxu0 %v30
  %v215 = vpop.f32.mrb[0].mxu0
  %v216 = vadd.f32 %v67, %v215
  %v217 = vpop.f32.mrb[0].mxu0
  %218 = vmatprep.mubr.f32.mxu0 0.0
  %219 = vmatmul.mubr.f32.gmra.mrb[0].mxu0 %v31
  %v220 = vpop.f32.mrb[0].mxu0
  %v221 = vadd.f32 %v67, %v220
  %v222 = vpop.f32.mrb[0].mxu0
  %223 = vmatprep.mubr.f32.mxu0 0.0
  %224 = vmatmul.mubr.f32.gmra.mrb[0].mxu0 %v32
  %v225 = vpop.f32.mrb[0].mxu0
  %v226 = vadd.f32 %v67, %v225
  %v227 = vpop.f32.mrb[0].mxu0
  %228 = vmatprep.mubr.f32.mxu0 0.0
  %229 = vmatmul.mubr.f32.gmra.mrb[0].mxu0 %v33
  %v230 = vpop.f32.mrb[0].mxu0
  %v231 = vadd.f32 %v67, %v230
  %v232 = vpop.f32.mrb[0].mxu0
  %233 = vmatprep.mubr.f32.mxu0 0.0
  %234 = vmatmul.mubr.f32.gmra.mrb[0].mxu0 %v34
  %v235 = vpop.f32.mrb[0].mxu0
  %v236 = vadd.f32 %v67, %v235
  %v237 = vpop.f32.mrb[0].mxu0
  %238 = vmatprep.mubr.f32.mxu0 0.0
  %239 = vmatmul.mubr.f32.gmra.mrb[0].mxu0 %v35
  %v240 = vpop.f32.mrb[0].mxu0
  %v241 = vadd.f32 %v67, %v240
  %v242 = vpop.f32.mrb[0].mxu0
  %243 = vmatprep.mubr.f32.mxu0 0.0
  %244 = vmatmul.mubr.f32.gmra.mrb[0].mxu0 %v36
  %v245 = vpop.f32.mrb[0].mxu0
  %v246 = vadd.f32 %v67, %v245
  %v247 = vpop.f32.mrb[0].mxu0
  %248 = vmatprep.mubr.f32.mxu0 0.0
  %249 = vmatmul.mubr.f32.gmra.mrb[0].mxu0 %v37
  %v250 = vpop.f32.mrb[0].mxu0
  %v251 = vadd.f32 %v67, %v250
  %v252 = vpop.f32.mrb[0].mxu0
  %253 = vmatprep.mubr.f32.mxu0 0.0
  %254 = vmatmul.mubr.f32.gmra.mrb[0].mxu0 %v38
  %v255 = vpop.f32.mrb[0].mxu0
  %v256 = vadd.f32 %v67, %v255
  %v257 = vpop.f32.mrb[0].mxu0
  %258 = vmatprep.mubr.f32.mxu0 0.0
  %259 = vmatmul.mubr.f32.gmra.mrb[0].mxu0 %v39
  %v260 = vpop.f32.mrb[0].mxu0
  %v261 = vadd.f32 %v67, %v260
  %v262 = vpop.f32.mrb[0].mxu0
  %263 = vmatprep.mubr.f32.mxu0 0.0
  %264 = vmatmul.mubr.f32.gmra.mrb[0].mxu0 %v40
  %v265 = vpop.f32.mrb[0].mxu0
  %v266 = vadd.f32 %v67, %v265
  %v267 = vpop.f32.mrb[0].mxu0
  %268 = vmatprep.mubr.f32.mxu0 0.0
  %269 = vmatmul.mubr.f32.gmra.mrb[0].mxu0 %v41
  %v270 = vpop.f32.mrb[0].mxu0
  %v271 = vadd.f32 %v67, %v270
  %v272 = vpop.f32.mrb[0].mxu0
  %273 = vmatprep.mubr.f32.mxu0 0.0
  %274 = vmatmul.mubr.f32.gmra.mrb[0].mxu0 %v42
  %v275 = vpop.f32.mrb[0].mxu0
  %v276 = vadd.f32 %v67, %v275
  %v277 = vpop.f32.mrb[0].mxu0
  %278 = vmatprep.mubr.f32.mxu0 0.0
  %279 = vmatmul.mubr.f32.gmra.mrb[0].mxu0 %v43
  %v280 = vpop.f32.mrb[0].mxu0
  %v281 = vadd.f32 %v67, %v280
  %v282 = vpop.f32.mrb[0].mxu0
  %283 = vmatprep.mubr.f32.mxu0 0.0
  %284 = vmatmul.mubr.f32.gmra.mrb[0].mxu0 %v44
  %v285 = vpop.f32.mrb[0].mxu0
  %v286 = vadd.f32 %v67, %v285
  %v287 = vpop.f32.mrb[0].mxu0
  %288 = vmatprep.mubr.f32.mxu0 0.0
  %289 = vmatmul.mubr.f32.gmra.mrb[0].mxu0 %v45
  %v290 = vpop.f32.mrb[0].mxu0
  %v291 = vadd.f32 %v67, %v290
  %v292 = vpop.f32.mrb[0].mxu0
  %293 = vdwg.mxu0
  %294 = vst [vmem:[%s3] sm:$0xff] %v136
  %295 = vst [vmem:[%s3 + $0x8] sm:$0xff] %v141
  %296 = vst [vmem:[%s3 + $0x10] sm:$0xff] %v146
  %297 = vst [vmem:[%s3 + $0x18] sm:$0xff] %v151
  %298 = vst [vmem:[%s3 + $0x20] sm:$0xff] %v156
  %299 = vst [vmem:[%s3 + $0x28] sm:$0xff] %v161
  %300 = vst [vmem:[%s3 + $0x30] sm:$0xff] %v166
  %301 = vst [vmem:[%s3 + $0x38] sm:$0xff] %v171
  %302 = vst [vmem:[%s3 + $0x40] sm:$0xff] %v176
  %303 = vst [vmem:[%s3 + $0x48] sm:$0xff] %v181
  %304 = vst [vmem:[%s3 + $0x50] sm:$0xff] %v186
  %305 = vst [vmem:[%s3 + $0x58] sm:$0xff] %v191
  %306 = vst [vmem:[%s3 + $0x60] sm:$0xff] %v196
  %307 = vst [vmem:[%s3 + $0x68] sm:$0xff] %v201
  %308 = vst [vmem:[%s3 + $0x70] sm:$0xff] %v206
  %309 = vst [vmem:[%s3 + $0x78] sm:$0xff] %v211
  %310 = vst [vmem:[%s3 + $0x80] sm:$0xff] %v216
  %311 = vst [vmem:[%s3 + $0x88] sm:$0xff] %v221
  %312 = vst [vmem:[%s3 + $0x90] sm:$0xff] %v226
  %313 = vst [vmem:[%s3 + $0x98] sm:$0xff] %v231
  %314 = vst [vmem:[%s3 + $0xa0] sm:$0xff] %v236
  %315 = vst [vmem:[%s3 + $0xa8] sm:$0xff] %v241
  %316 = vst [vmem:[%s3 + $0xb0] sm:$0xff] %v246
  %317 = vst [vmem:[%s3 + $0xb8] sm:$0xff] %v251
  %318 = vst [vmem:[%s3 + $0xc0] sm:$0xff] %v256
  %319 = vst [vmem:[%s3 + $0xc8] sm:$0xff] %v261
  %320 = vst [vmem:[%s3 + $0xd0] sm:$0xff] %v266
  %321 = vst [vmem:[%s3 + $0xd8] sm:$0xff] %v271
  %322 = vst [vmem:[%s3 + $0xe0] sm:$0xff] %v276
  %323 = vst [vmem:[%s3 + $0xe8] sm:$0xff] %v281
  %324 = vst [vmem:[%s3 + $0xf0] sm:$0xff] %v286
  %325 = vst [vmem:[%s3 + $0xf8] sm:$0xff] %v291
  // Predicated region
  $region14: #{multi_head2.6} parent=0 // pred_check
    _
  $region15: #{multi_head2.6} parent=0 // pred_check_branch
    %327 = sbr.rel (0) target = $region17
  $region16: #{multi_head2.6} parent=0 // pred_region
    _
  $region17: #{multi_head2.6} parent=0 // pred_fallthru
    _
  // Predicated region
  $region18: #{multi_head2.6} parent=0 // pred_check
    _
  $region19: #{multi_head2.6} parent=0 // pred_check_branch
    %329 = sbr.rel (0) target = $region21
  $region20: #{multi_head2.6} parent=0 // pred_region
    _
  $region21: #{multi_head2.6} parent=0 // pred_fallthru
    _

// kernel: multi_head2.8
$region0: #{multi_head2.8}
  #allocation0 [shape = 'u32[]', space=smem, size = 0x4, offset = 0x4, fixed_abs, tag = 'smem constant byte address 0x4 - core index']
  #allocation1 [shape = 'u32[144,128]{1,0:T(1,128)}', space=vmem, size = 0x12000, scoped, tag = 'internal scratch']
  #allocation2 [shape = 'f32[128,1]{1,0:T(8,128)}', space=vmem, size = 0x10000, scoped, tag = 'scratch operand']
  #allocation3 [shape = 'f32[128,1]{1,0:T(8,128)}', space=vmem, size = 0x10000, scoped, tag = 'scratch operand']
  #allocation4 [shape = 'f32[128,128]{1,0:T(8,128)}', space=vmem, size = 0x10000, scoped, tag = 'scratch operand']
  %s0 = inlined_call_operand.vmem [shape: f32[8,128,128], index: 0, kind: input, shape index: {}]
  %s1 = inlined_call_operand.vmem [shape: f32[8,128,128], index: 1, kind: input, shape index: {}]
  %s2 = inlined_call_operand.vmem [shape: f32[8,128,128], index: 2, kind: input, shape index: {}]
  %s3 = inlined_call_operand.vmem [shape: f32[8,128,128], index: 3, kind: output, shape index: {}]
  %s4 = sld [smem:[#allocation0]]
  $region53: #{multi_head2.8} parent=0
    _
  %s6 = ssub.s32 1, %s4
  %s7 = scalar_select 0, %s6, %s4
  loop: start=0, step=1, limit=10
  $region2: #{multi_head2.8} parent=0 // loop_pre_header
    _
  $region3: #{multi_head2.8} parent=0 // loop_header
    %s9 = sphi 0, %s13
    %p10 = scmp.ge.s32.totalorder %s9, 10
    %s16 = sphi 0, %s35
    %s17 = sphi 0, %s31
    %s18 = sphi 0, %s27
    %s19 = sphi 0, %s16
    %s20 = sphi 0, %s17
    %s21 = sphi 0, %s18
    %s22 = sphi 0, %s19
    %s23 = sphi 0, %s20
    %s24 = sphi 0, %s21
    %s40 = sphi 0, %s42
    %s43 = sphi 0, %s40
    %s44 = sphi 0, %s43
    %s60 = sphi 0, %s44
    %s68 = sphi 0, %s70
    %s71 = sphi 0, %s68
    %s72 = sphi 0, %s71
    %s88 = sphi 0, %s72
    %s96 = sphi 0, %s98
    %s99 = sphi 0, %s96
    %s100 = sphi 0, %s99
    %s116 = sphi 0, %s100
    %s124 = sphi 0, %s126
    %s127 = sphi 0, %s124
    %s128 = sphi 0, %s127
    %s144 = sphi 0, %s128
  $region4: #{multi_head2.8} parent=0 // loop_header_branch
    %12 = sbr.rel (%p10) target = $region8
  $region5: #{multi_head2.8} parent=0 // loop_body
    %s14 = ssub.s32 %s9, 1
    %s15 = ssub.s32 %s9, 2
    %s25 = sadd.s32 1, %s18
    %p26 = scmp.ge.s32.totalorder %s25, 1
    %s27 = scalar_select %p26, 0, %s25
    %s28 = sadd.s32 1, %s17
    %s29 = scalar_select %p26, %s28, %s17
    %p30 = scmp.ge.s32.totalorder %s29, 1
    %s31 = scalar_select %p30, 0, %s29
    %s32 = sadd.s32 1, %s16
    %s33 = scalar_select %p30, %s32, %s16
    %p34 = scmp.ge.s32.totalorder %s33, 8
    %s35 = scalar_select %p34, 0, %s33
    %s36 = ssub.s32 %s16, %s35
    %s37 = ssub.s32 %s17, %s31
    %s38 = sor.u32 %s36, %s37
    %p39 = scmp.eq.s32.totalorder %s38, 0
    %s41 = sadd.s32 %s40, 1
    %s42 = scalar_select %p39, %s40, %s41
    %p45 = pneg %p39
    %p46 = scmp.eq.s32.totalorder %s9, 7
    %p47 = por %p45, %p46
    %p48 = scmp.ne.s32.totalorder %s40, %s43
    %p49 = scmp.eq.s32.totalorder %s9, 0
    %p50 = por %p48, %p49
    %p51 = scmp.ne.s32.totalorder %s40, %s43
    %p52 = scmp.eq.s32.totalorder %s14, 7
    %p53 = por %p51, %p52
    %p54 = scmp.ne.s32.totalorder %s43, %s44
    %p55 = scmp.eq.s32.totalorder %s14, 0
    %p56 = por %p54, %p55
    %p57 = scmp.ne.s32.totalorder %s43, %s44
    %p58 = scmp.eq.s32.totalorder %s15, 7
    %p59 = por %p57, %p58
    %p61 = scmp.ne.s32.totalorder %s44, %s60
    %p62 = scmp.eq.s32.totalorder %s15, 0
    %p63 = por %p61, %p62
    %s64 = ssub.s32 %s16, %s35
    %s65 = ssub.s32 %s18, %s27
    %s66 = sor.u32 %s64, %s65
    %p67 = scmp.eq.s32.totalorder %s66, 0
    %s69 = sadd.s32 %s68, 1
    %s70 = scalar_select %p67, %s68, %s69
    %p73 = pneg %p67
    %p74 = scmp.eq.s32.totalorder %s9, 7
    %p75 = por %p73, %p74
    %p76 = scmp.ne.s32.totalorder %s68, %s71
    %p77 = scmp.eq.s32.totalorder %s9, 0
    %p78 = por %p76, %p77
    %p79 = scmp.ne.s32.totalorder %s68, %s71
    %p80 = scmp.eq.s32.totalorder %s14, 7
    %p81 = por %p79, %p80
    %p82 = scmp.ne.s32.totalorder %s71, %s72
    %p83 = scmp.eq.s32.totalorder %s14, 0
    %p84 = por %p82, %p83
    %p85 = scmp.ne.s32.totalorder %s71, %s72
    %p86 = scmp.eq.s32.totalorder %s15, 7
    %p87 = por %p85, %p86
    %p89 = scmp.ne.s32.totalorder %s72, %s88
    %p90 = scmp.eq.s32.totalorder %s15, 0
    %p91 = por %p89, %p90
    %s92 = ssub.s32 %s16, %s35
    %s93 = ssub.s32 %s18, %s27
    %s94 = sor.u32 %s92, %s93
    %p95 = scmp.eq.s32.totalorder %s94, 0
    %s97 = sadd.s32 %s96, 1
    %s98 = scalar_select %p95, %s96, %s97
    %p101 = pneg %p95
    %p102 = scmp.eq.s32.totalorder %s9, 7
    %p103 = por %p101, %p102
    %p104 = scmp.ne.s32.totalorder %s96, %s99
    %p105 = scmp.eq.s32.totalorder %s9, 0
    %p106 = por %p104, %p105
    %p107 = scmp.ne.s32.totalorder %s96, %s99
    %p108 = scmp.eq.s32.totalorder %s14, 7
    %p109 = por %p107, %p108
    %p110 = scmp.ne.s32.totalorder %s99, %s100
    %p111 = scmp.eq.s32.totalorder %s14, 0
    %p112 = por %p110, %p111
    %p113 = scmp.ne.s32.totalorder %s99, %s100
    %p114 = scmp.eq.s32.totalorder %s15, 7
    %p115 = por %p113, %p114
    %p117 = scmp.ne.s32.totalorder %s100, %s116
    %p118 = scmp.eq.s32.totalorder %s15, 0
    %p119 = por %p117, %p118
    %s120 = ssub.s32 %s16, %s35
    %s121 = ssub.s32 %s17, %s31
    %s122 = sor.u32 %s120, %s121
    %p123 = scmp.eq.s32.totalorder %s122, 0
    %s125 = sadd.s32 %s124, 1
    %s126 = scalar_select %p123, %s124, %s125
    %p129 = pneg %p123
    %p130 = scmp.eq.s32.totalorder %s9, 7
    %p131 = por %p129, %p130
    %p132 = scmp.ne.s32.totalorder %s124, %s127
    %p133 = scmp.eq.s32.totalorder %s9, 0
    %p134 = por %p132, %p133
    %p135 = scmp.ne.s32.totalorder %s124, %s127
    %p136 = scmp.eq.s32.totalorder %s14, 7
    %p137 = por %p135, %p136
    %p138 = scmp.ne.s32.totalorder %s127, %s128
    %p139 = scmp.eq.s32.totalorder %s14, 0
    %p140 = por %p138, %p139
    %p141 = scmp.ne.s32.totalorder %s127, %s128
    %p142 = scmp.eq.s32.totalorder %s15, 7
    %p143 = por %p141, %p142
    %p145 = scmp.ne.s32.totalorder %s128, %s144
    %p146 = scmp.eq.s32.totalorder %s15, 0
    %p147 = por %p145, %p146
    %p148 = scmp.le.s32.totalorder 1, %s9
    %p149 = scmp.lt.s32.totalorder %s9, 9
    %p150 = pnand %p148, %p149
    %p151 = pneg %p150
    // Predicated region
    $region9: #{multi_head2.8} parent=5 // pred_check
      _
    $region10: #{multi_head2.8} parent=5 // pred_check_branch
      %153 = sbr.rel (%p150) target = $region12
    $region11: #{multi_head2.8} parent=5 // pred_region
      %s154 = ssub.s32 %s9, 1
    $region12: #{multi_head2.8} parent=5 // pred_fallthru
      _
    %p155 = scmp.lt.s32.totalorder %s9, 8
    // Predicated region
    $region13: #{multi_head2.8} parent=5 // pred_check
      %p156 = pneg %p155
    $region14: #{multi_head2.8} parent=5 // pred_check_branch
      %158 = sbr.rel (%p156) target = $region16
    $region15: #{multi_head2.8} parent=5 // pred_region
      // Predicated region
      $region17: #{multi_head2.8} parent=15 // pred_check
        %p159 = pneg %p50
      $region18: #{multi_head2.8} parent=15 // pred_check_branch
        %161 = sbr.rel (%p159) target = $region20
      $region19: #{multi_head2.8} parent=15 // pred_region
        %s162 = smul.u32 16, %s17
        %p163 = scmp.lt.s32.totalorder %s16, 7
        %s164 = scalar_select %p163, %s16, 7
        %p165 = scmp.lt.s32.totalorder %s162, 15
        %s166 = scalar_select %p165, %s162, 15
        %s167 = smul.addr %s164, 16
        %s168 = sadd.s32 %s166, %s167
        %s169 = smul.addr %s168, 8
        %s170 = scalar_lea.vmem %s0, %s169
        %s171 = smul.u32 16, %s17
      $region20: #{multi_head2.8} parent=15 // pred_fallthru
        _
      // Predicated region
      $region21: #{multi_head2.8} parent=15 // pred_check
        %p172 = pneg %p78
      $region22: #{multi_head2.8} parent=15 // pred_check_branch
        %174 = sbr.rel (%p172) target = $region24
      $region23: #{multi_head2.8} parent=15 // pred_region
        %s175 = smul.u32 16, %s18
        %p176 = scmp.lt.s32.totalorder %s16, 7
        %s177 = scalar_select %p176, %s16, 7
        %p178 = scmp.lt.s32.totalorder %s175, 15
        %s179 = scalar_select %p178, %s175, 15
        %s180 = smul.addr %s177, 16
        %s181 = sadd.s32 %s179, %s180
        %s182 = smul.addr %s181, 8
        %s183 = scalar_lea.vmem %s1, %s182
        %s184 = smul.u32 16, %s18
      $region24: #{multi_head2.8} parent=15 // pred_fallthru
        _
      // Predicated region
      $region25: #{multi_head2.8} parent=15 // pred_check
        %p185 = pneg %p106
      $region26: #{multi_head2.8} parent=15 // pred_check_branch
        %187 = sbr.rel (%p185) target = $region28
      $region27: #{multi_head2.8} parent=15 // pred_region
        %s188 = smul.u32 16, %s18
        %p189 = scmp.lt.s32.totalorder %s16, 7
        %s190 = scalar_select %p189, %s16, 7
        %p191 = scmp.lt.s32.totalorder %s188, 15
        %s192 = scalar_select %p191, %s188, 15
        %s193 = smul.addr %s190, 16
        %s194 = sadd.s32 %s192, %s193
        %s195 = smul.addr %s194, 8
        %s196 = scalar_lea.vmem %s2, %s195
        %s197 = smul.u32 16, %s18
      $region28: #{multi_head2.8} parent=15 // pred_fallthru
        _
    $region16: #{multi_head2.8} parent=5 // pred_fallthru
      _
    %p198 = scmp.le.s32.totalorder 1, %s9
    %p199 = scmp.lt.s32.totalorder %s9, 9
    %p200 = pnand %p198, %p199
    %p201 = pneg %p200
    // Predicated region
    $region29: #{multi_head2.8} parent=5 // pred_check
      _
    $region30: #{multi_head2.8} parent=5 // pred_check_branch
      %203 = sbr.rel (%p200) target = $region32
    $region31: #{multi_head2.8} parent=5 // pred_region
      %s204 = ssub.s32 %s9, 1
      %s205 = smul.u32 16, %s20
      %p206 = scmp.lt.s32.totalorder %s19, 7
      %s207 = scalar_select %p206, %s19, 7
      %p208 = scmp.lt.s32.totalorder %s205, 15
      %s209 = scalar_select %p208, %s205, 15
      %s210 = smul.addr %s207, 16
      %s211 = sadd.s32 %s209, %s210
      %s212 = smul.addr %s211, 8
      %s213 = scalar_lea.vmem %s0, %s212
      %p214 = pneg %p56
      %p215 = pneg %p53
      %s216 = smul.u32 16, %s21
      %p217 = scmp.lt.s32.totalorder %s19, 7
      %s218 = scalar_select %p217, %s19, 7
      %p219 = scmp.lt.s32.totalorder %s216, 15
      %s220 = scalar_select %p219, %s216, 15
      %s221 = smul.addr %s218, 16
      %s222 = sadd.s32 %s220, %s221
      %s223 = smul.addr %s222, 8
      %s224 = scalar_lea.vmem %s1, %s223
      %p225 = pneg %p84
      %p226 = pneg %p81
      %s227 = smul.u32 16, %s21
      %p228 = scmp.lt.s32.totalorder %s19, 7
      %s229 = scalar_select %p228, %s19, 7
      %p230 = scmp.lt.s32.totalorder %s227, 15
      %s231 = scalar_select %p230, %s227, 15
      %s232 = smul.addr %s229, 16
      %s233 = sadd.s32 %s231, %s232
      %s234 = smul.addr %s233, 8
      %s235 = scalar_lea.vmem %s2, %s234
      %p236 = pneg %p112
      %p237 = pneg %p109
      %p238 = pneg %p140
      %p239 = pneg %p137
      %s240 = smul.u32 16, %s20
      %p241 = scmp.lt.s32.totalorder %s19, 7
      %s242 = scalar_select %p241, %s19, 7
      %p243 = scmp.lt.s32.totalorder %s240, 15
      %s244 = scalar_select %p243, %s240, 15
      %s245 = smul.addr %s242, 16
      %s246 = sadd.s32 %s244, %s245
      %s247 = smul.addr %s246, 8
      %s248 = scalar_lea.vmem %s3, %s247
      %s249 = smul.u32 16, %s20
      %p250 = scmp.lt.s32.totalorder %s19, 7
      %s251 = scalar_select %p250, %s19, 7
      %p252 = scmp.lt.s32.totalorder %s249, 15
      %s253 = scalar_select %p252, %s249, 15
      %s254 = smul.addr %s251, 16
      %s255 = sadd.s32 %s253, %s254
      %s256 = smul.addr %s255, 8
      %s257 = scalar_lea.vmem %s0, %s256
      %s258 = smul.u32 16, %s20
      %s259 = smul.u32 16, %s21
      %p260 = scmp.lt.s32.totalorder %s19, 7
      %s261 = scalar_select %p260, %s19, 7
      %p262 = scmp.lt.s32.totalorder %s259, 15
      %s263 = scalar_select %p262, %s259, 15
      %s264 = smul.addr %s261, 16
      %s265 = sadd.s32 %s263, %s264
      %s266 = smul.addr %s265, 8
      %s267 = scalar_lea.vmem %s1, %s266
      %s268 = smul.u32 16, %s21
      %s269 = smul.u32 16, %s21
      %p270 = scmp.lt.s32.totalorder %s19, 7
      %s271 = scalar_select %p270, %s19, 7
      %p272 = scmp.lt.s32.totalorder %s269, 15
      %s273 = scalar_select %p272, %s269, 15
      %s274 = smul.addr %s271, 16
      %s275 = sadd.s32 %s273, %s274
      %s276 = smul.addr %s275, 8
      %s277 = scalar_lea.vmem %s2, %s276
      %s278 = smul.u32 16, %s21
      %s279 = smul.u32 16, %s20
      %p280 = scmp.lt.s32.totalorder %s19, 7
      %s281 = scalar_select %p280, %s19, 7
      %p282 = scmp.lt.s32.totalorder %s279, 15
      %s283 = scalar_select %p282, %s279, 15
      %s284 = smul.addr %s281, 16
      %s285 = sadd.s32 %s283, %s284
      %s286 = smul.addr %s285, 8
      %s287 = scalar_lea.vmem %s3, %s286
      %s288 = smul.u32 16, %s20
      %p289 = scmp.eq.s32.totalorder %s21, 0
      // Predicated region
      $region33: #{multi_head2.8} parent=31 // pred_check
        %p290 = pneg %p289
      $region34: #{multi_head2.8} parent=31 // pred_check_branch
        %292 = sbr.rel (%p290) target = $region36
      $region35: #{multi_head2.8} parent=31 // pred_region
        %vm293 = vcmask 7168
        %294 = vst.msk [vmem:[#allocation2] sm:$0xff] %vm293, -inf
        %295 = vst.msk [vmem:[#allocation2 + $0x8] sm:$0xff] %vm293, -inf
        %296 = vst.msk [vmem:[#allocation2 + $0x10] sm:$0xff] %vm293, -inf
        %297 = vst.msk [vmem:[#allocation2 + $0x18] sm:$0xff] %vm293, -inf
        %298 = vst.msk [vmem:[#allocation2 + $0x20] sm:$0xff] %vm293, -inf
        %299 = vst.msk [vmem:[#allocation2 + $0x28] sm:$0xff] %vm293, -inf
        %300 = vst.msk [vmem:[#allocation2 + $0x30] sm:$0xff] %vm293, -inf
        %301 = vst.msk [vmem:[#allocation2 + $0x38] sm:$0xff] %vm293, -inf
        %302 = vst.msk [vmem:[#allocation2 + $0x40] sm:$0xff] %vm293, -inf
        %303 = vst.msk [vmem:[#allocation2 + $0x48] sm:$0xff] %vm293, -inf
        %304 = vst.msk [vmem:[#allocation2 + $0x50] sm:$0xff] %vm293, -inf
        %305 = vst.msk [vmem:[#allocation2 + $0x58] sm:$0xff] %vm293, -inf
        %306 = vst.msk [vmem:[#allocation2 + $0x60] sm:$0xff] %vm293, -inf
        %307 = vst.msk [vmem:[#allocation2 + $0x68] sm:$0xff] %vm293, -inf
        %308 = vst.msk [vmem:[#allocation2 + $0x70] sm:$0xff] %vm293, -inf
        %309 = vst.msk [vmem:[#allocation2 + $0x78] sm:$0xff] %vm293, -inf
        %310 = vst.msk [vmem:[#allocation3] sm:$0xff] %vm293, 0.0
        %311 = vst.msk [vmem:[#allocation3 + $0x8] sm:$0xff] %vm293, 0.0
        %312 = vst.msk [vmem:[#allocation3 + $0x10] sm:$0xff] %vm293, 0.0
        %313 = vst.msk [vmem:[#allocation3 + $0x18] sm:$0xff] %vm293, 0.0
        %314 = vst.msk [vmem:[#allocation3 + $0x20] sm:$0xff] %vm293, 0.0
        %315 = vst.msk [vmem:[#allocation3 + $0x28] sm:$0xff] %vm293, 0.0
        %316 = vst.msk [vmem:[#allocation3 + $0x30] sm:$0xff] %vm293, 0.0
        %317 = vst.msk [vmem:[#allocation3 + $0x38] sm:$0xff] %vm293, 0.0
        %318 = vst.msk [vmem:[#allocation3 + $0x40] sm:$0xff] %vm293, 0.0
        %319 = vst.msk [vmem:[#allocation3 + $0x48] sm:$0xff] %vm293, 0.0
        %320 = vst.msk [vmem:[#allocation3 + $0x50] sm:$0xff] %vm293, 0.0
        %321 = vst.msk [vmem:[#allocation3 + $0x58] sm:$0xff] %vm293, 0.0
        %322 = vst.msk [vmem:[#allocation3 + $0x60] sm:$0xff] %vm293, 0.0
        %323 = vst.msk [vmem:[#allocation3 + $0x68] sm:$0xff] %vm293, 0.0
        %324 = vst.msk [vmem:[#allocation3 + $0x70] sm:$0xff] %vm293, 0.0
        %325 = vst.msk [vmem:[#allocation3 + $0x78] sm:$0xff] %vm293, 0.0
        %326 = vst [vmem:[#allocation4] sm:$0xff] 0.0
        %327 = vst [vmem:[#allocation4 + $0x8] sm:$0xff] 0.0
        %328 = vst [vmem:[#allocation4 + $0x10] sm:$0xff] 0.0
        %329 = vst [vmem:[#allocation4 + $0x18] sm:$0xff] 0.0
        %330 = vst [vmem:[#allocation4 + $0x20] sm:$0xff] 0.0
        %331 = vst [vmem:[#allocation4 + $0x28] sm:$0xff] 0.0
        %332 = vst [vmem:[#allocation4 + $0x30] sm:$0xff] 0.0
        %333 = vst [vmem:[#allocation4 + $0x38] sm:$0xff] 0.0
        %334 = vst [vmem:[#allocation4 + $0x40] sm:$0xff] 0.0
        %335 = vst [vmem:[#allocation4 + $0x48] sm:$0xff] 0.0
        %336 = vst [vmem:[#allocation4 + $0x50] sm:$0xff] 0.0
        %337 = vst [vmem:[#allocation4 + $0x58] sm:$0xff] 0.0
        %338 = vst [vmem:[#allocation4 + $0x60] sm:$0xff] 0.0
        %339 = vst [vmem:[#allocation4 + $0x68] sm:$0xff] 0.0
        %340 = vst [vmem:[#allocation4 + $0x70] sm:$0xff] 0.0
        %341 = vst [vmem:[#allocation4 + $0x78] sm:$0xff] 0.0
      $region36: #{multi_head2.8} parent=31 // pred_fallthru
        _
      %v342 = vld [vmem:[%s257] sm:$0xff]
      %v343 = vld [vmem:[%s257 + $0x8] sm:$0xff]
      %v344 = vld [vmem:[%s257 + $0x10] sm:$0xff]
      %v345 = vld [vmem:[%s257 + $0x18] sm:$0xff]
      %v346 = vld [vmem:[%s257 + $0x20] sm:$0xff]
      %v347 = vld [vmem:[%s257 + $0x28] sm:$0xff]
      %v348 = vld [vmem:[%s257 + $0x30] sm:$0xff]
      %v349 = vld [vmem:[%s257 + $0x38] sm:$0xff]
      %v350 = vld [vmem:[%s257 + $0x40] sm:$0xff]
      %v351 = vld [vmem:[%s257 + $0x48] sm:$0xff]
      %v352 = vld [vmem:[%s257 + $0x50] sm:$0xff]
      %v353 = vld [vmem:[%s257 + $0x58] sm:$0xff]
      %v354 = vld [vmem:[%s257 + $0x60] sm:$0xff]
      %v355 = vld [vmem:[%s257 + $0x68] sm:$0xff]
      %v356 = vld [vmem:[%s257 + $0x70] sm:$0xff]
      %v357 = vld [vmem:[%s257 + $0x78] sm:$0xff]
      %v358 = vld [vmem:[%s267] sm:$0xff]
      %v359 = vld [vmem:[%s267 + $0x8] sm:$0xff]
      %v360 = vld [vmem:[%s267 + $0x10] sm:$0xff]
      %v361 = vld [vmem:[%s267 + $0x18] sm:$0xff]
      %v362 = vld [vmem:[%s267 + $0x20] sm:$0xff]
      %v363 = vld [vmem:[%s267 + $0x28] sm:$0xff]
      %v364 = vld [vmem:[%s267 + $0x30] sm:$0xff]
      %v365 = vld [vmem:[%s267 + $0x38] sm:$0xff]
      %v366 = vld [vmem:[%s267 + $0x40] sm:$0xff]
      %v367 = vld [vmem:[%s267 + $0x48] sm:$0xff]
      %v368 = vld [vmem:[%s267 + $0x50] sm:$0xff]
      %v369 = vld [vmem:[%s267 + $0x58] sm:$0xff]
      %v370 = vld [vmem:[%s267 + $0x60] sm:$0xff]
      %v371 = vld [vmem:[%s267 + $0x68] sm:$0xff]
      %v372 = vld [vmem:[%s267 + $0x70] sm:$0xff]
      %v373 = vld [vmem:[%s267 + $0x78] sm:$0xff]
      %374 = vmatprep.subr.mxu0 0.0
      %375 = vmatpush1.xpose.msra.mxu0 %v358
      %376 = vmatprep.subr.mxu0 0.0
      %377 = vmatpush1.xpose.msra.mxu0 %v359
      %378 = vmatprep.subr.mxu0 0.0
      %379 = vmatpush1.xpose.msra.mxu0 %v360
      %380 = vmatprep.subr.mxu0 0.0
      %381 = vmatpush1.xpose.msra.mxu0 %v361
      %382 = vmatprep.subr.mxu0 0.0
      %383 = vmatpush1.xpose.msra.mxu0 %v362
      %384 = vmatprep.subr.mxu0 0.0
      %385 = vmatpush1.xpose.msra.mxu0 %v363
      %386 = vmatprep.subr.mxu0 0.0
      %387 = vmatpush1.xpose.msra.mxu0 %v364
      %388 = vmatprep.subr.mxu0 0.0
      %389 = vmatpush1.xpose.msra.mxu0 %v365
      %390 = vmatprep.subr.mxu0 0.0
      %391 = vmatpush1.xpose.msra.mxu0 %v366
      %392 = vmatprep.subr.mxu0 0.0
      %393 = vmatpush1.xpose.msra.mxu0 %v367
      %394 = vmatprep.subr.mxu0 0.0
      %395 = vmatpush1.xpose.msra.mxu0 %v368
      %396 = vmatprep.subr.mxu0 0.0
      %397 = vmatpush1.xpose.msra.mxu0 %v369
      %398 = vmatprep.subr.mxu0 0.0
      %399 = vmatpush1.xpose.msra.mxu0 %v370
      %400 = vmatprep.subr.mxu0 0.0
      %401 = vmatpush1.xpose.msra.mxu0 %v371
      %402 = vmatprep.subr.mxu0 0.0
      %403 = vmatpush1.xpose.msra.mxu0 %v372
      %404 = vmatprep.subr.mxu0 0.0
      %405 = vmatpush1.xpose.msra.mxu0 %v373
      %406 = vmatprep.subr.mxu0 0.0
      %407 = vmatpush1.xpose.msra.mxu0 0.0
      %408 = vmatprep.subr.mxu0 0.0
      %409 = vmatpush1.xpose.msra.mxu0 0.0
      %410 = vmatprep.subr.mxu0 0.0
      %411 = vmatpush1.xpose.msra.mxu0 0.0
      %412 = vmatprep.subr.mxu0 0.0
      %413 = vmatpush1.xpose.msra.mxu0 0.0
      %414 = vmatprep.subr.mxu0 0.0
      %415 = vmatpush1.xpose.msra.mxu0 0.0
      %416 = vmatprep.subr.mxu0 0.0
      %417 = vmatpush1.xpose.msra.mxu0 0.0
      %418 = vmatprep.subr.mxu0 0.0
      %419 = vmatpush1.xpose.msra.mxu0 0.0
      %420 = vmatprep.subr.mxu0 0.0
      %421 = vmatpush1.xpose.msra.mxu0 0.0
      %422 = vmatprep.subr.mxu0 0.0
      %423 = vmatpush1.xpose.msra.mxu0 0.0
      %424 = vmatprep.subr.mxu0 0.0
      %425 = vmatpush1.xpose.msra.mxu0 0.0
      %426 = vmatprep.subr.mxu0 0.0
      %427 = vmatpush1.xpose.msra.mxu0 0.0
      %428 = vmatprep.subr.mxu0 0.0
      %429 = vmatpush1.xpose.msra.mxu0 0.0
      %430 = vmatprep.subr.mxu0 0.0
      %431 = vmatpush1.xpose.msra.mxu0 0.0
      %432 = vmatprep.subr.mxu0 0.0
      %433 = vmatpush1.xpose.msra.mxu0 0.0
      %434 = vmatprep.subr.mxu0 0.0
      %435 = vmatpush1.xpose.msra.mxu0 0.0
      %436 = vmatprep.subr.mxu0 0.0
      %437 = vmatpush1.xpose.msra.mxu0 0.0
      %438 = vmatprep.mubr.f32.mxu0 0.0
      %439 = vmatmul.mubr.f32.gmra.mrb[0].mxu0 %v342
      %v440 = vpop.f32.mrb[0].mxu0
      %v441 = vadd.f32 0.0, %v440
      %v442 = vpop.f32.mrb[0].mxu0
      %443 = vmatprep.mubr.f32.mxu0 0.0
      %444 = vmatmul.mubr.f32.gmra.mrb[0].mxu0 %v343
      %v445 = vpop.f32.mrb[0].mxu0
      %v446 = vadd.f32 0.0, %v445
      %v447 = vpop.f32.mrb[0].mxu0
      %448 = vmatprep.mubr.f32.mxu0 0.0
      %449 = vmatmul.mubr.f32.gmra.mrb[0].mxu0 %v344
      %v450 = vpop.f32.mrb[0].mxu0
      %v451 = vadd.f32 0.0, %v450
      %v452 = vpop.f32.mrb[0].mxu0
      %453 = vmatprep.mubr.f32.mxu0 0.0
      %454 = vmatmul.mubr.f32.gmra.mrb[0].mxu0 %v345
      %v455 = vpop.f32.mrb[0].mxu0
      %v456 = vadd.f32 0.0, %v455
      %v457 = vpop.f32.mrb[0].mxu0
      %458 = vmatprep.mubr.f32.mxu0 0.0
      %459 = vmatmul.mubr.f32.gmra.mrb[0].mxu0 %v346
      %v460 = vpop.f32.mrb[0].mxu0
      %v461 = vadd.f32 0.0, %v460
      %v462 = vpop.f32.mrb[0].mxu0
      %463 = vmatprep.mubr.f32.mxu0 0.0
      %464 = vmatmul.mubr.f32.gmra.mrb[0].mxu0 %v347
      %v465 = vpop.f32.mrb[0].mxu0
      %v466 = vadd.f32 0.0, %v465
      %v467 = vpop.f32.mrb[0].mxu0
      %468 = vmatprep.mubr.f32.mxu0 0.0
      %469 = vmatmul.mubr.f32.gmra.mrb[0].mxu0 %v348
      %v470 = vpop.f32.mrb[0].mxu0
      %v471 = vadd.f32 0.0, %v470
      %v472 = vpop.f32.mrb[0].mxu0
      %473 = vmatprep.mubr.f32.mxu0 0.0
      %474 = vmatmul.mubr.f32.gmra.mrb[0].mxu0 %v349
      %v475 = vpop.f32.mrb[0].mxu0
      %v476 = vadd.f32 0.0, %v475
      %v477 = vpop.f32.mrb[0].mxu0
      %478 = vmatprep.mubr.f32.mxu0 0.0
      %479 = vmatmul.mubr.f32.gmra.mrb[0].mxu0 %v350
      %v480 = vpop.f32.mrb[0].mxu0
      %v481 = vadd.f32 0.0, %v480
      %v482 = vpop.f32.mrb[0].mxu0
      %483 = vmatprep.mubr.f32.mxu0 0.0
      %484 = vmatmul.mubr.f32.gmra.mrb[0].mxu0 %v351
      %v485 = vpop.f32.mrb[0].mxu0
      %v486 = vadd.f32 0.0, %v485
      %v487 = vpop.f32.mrb[0].mxu0
      %488 = vmatprep.mubr.f32.mxu0 0.0
      %489 = vmatmul.mubr.f32.gmra.mrb[0].mxu0 %v352
      %v490 = vpop.f32.mrb[0].mxu0
      %v491 = vadd.f32 0.0, %v490
      %v492 = vpop.f32.mrb[0].mxu0
      %493 = vmatprep.mubr.f32.mxu0 0.0
      %494 = vmatmul.mubr.f32.gmra.mrb[0].mxu0 %v353
      %v495 = vpop.f32.mrb[0].mxu0
      %v496 = vadd.f32 0.0, %v495
      %v497 = vpop.f32.mrb[0].mxu0
      %498 = vmatprep.mubr.f32.mxu0 0.0
      %499 = vmatmul.mubr.f32.gmra.mrb[0].mxu0 %v354
      %v500 = vpop.f32.mrb[0].mxu0
      %v501 = vadd.f32 0.0, %v500
      %v502 = vpop.f32.mrb[0].mxu0
      %503 = vmatprep.mubr.f32.mxu0 0.0
      %504 = vmatmul.mubr.f32.gmra.mrb[0].mxu0 %v355
      %v505 = vpop.f32.mrb[0].mxu0
      %v506 = vadd.f32 0.0, %v505
      %v507 = vpop.f32.mrb[0].mxu0
      %508 = vmatprep.mubr.f32.mxu0 0.0
      %509 = vmatmul.mubr.f32.gmra.mrb[0].mxu0 %v356
      %v510 = vpop.f32.mrb[0].mxu0
      %v511 = vadd.f32 0.0, %v510
      %v512 = vpop.f32.mrb[0].mxu0
      %513 = vmatprep.mubr.f32.mxu0 0.0
      %514 = vmatmul.mubr.f32.gmra.mrb[0].mxu0 %v357
      %v515 = vpop.f32.mrb[0].mxu0
      %v516 = vadd.f32 0.0, %v515
      %v517 = vpop.f32.mrb[0].mxu0
      %518 = vdwg.mxu0
      %v519 = vmul.f32 %v441, 0.17677669
      %v520 = vmul.f32 %v446, 0.17677669
      %v521 = vmul.f32 %v451, 0.17677669
      %v522 = vmul.f32 %v456, 0.17677669
      %v523 = vmul.f32 %v461, 0.17677669
      %v524 = vmul.f32 %v466, 0.17677669
      %v525 = vmul.f32 %v471, 0.17677669
      %v526 = vmul.f32 %v476, 0.17677669
      %v527 = vmul.f32 %v481, 0.17677669
      %v528 = vmul.f32 %v486, 0.17677669
      %v529 = vmul.f32 %v491, 0.17677669
      %v530 = vmul.f32 %v496, 0.17677669
      %v531 = vmul.f32 %v501, 0.17677669
      %v532 = vmul.f32 %v506, 0.17677669
      %v533 = vmul.f32 %v511, 0.17677669
      %v534 = vmul.f32 %v516, 0.17677669
      %s535 = smul.u32 %s21, 128
      %v536 = vlaneseq
      %v537 = vand.u32 %v536, 127
      %v538 = vstv %s535
      %v539 = vadd.s32 %v538, %v537
      %vm540 = vcmp.ge.s32.totalorder %v539, 8
      %v541 = vsel %vm540, -1e+09, %v519
      %v542 = vsel %vm540, -1e+09, %v520
      %v543 = vsel %vm540, -1e+09, %v521
      %v544 = vsel %vm540, -1e+09, %v522
      %v545 = vsel %vm540, -1e+09, %v523
      %v546 = vsel %vm540, -1e+09, %v524
      %v547 = vsel %vm540, -1e+09, %v525
      %v548 = vsel %vm540, -1e+09, %v526
      %v549 = vsel %vm540, -1e+09, %v527
      %v550 = vsel %vm540, -1e+09, %v528
      %v551 = vsel %vm540, -1e+09, %v529
      %v552 = vsel %vm540, -1e+09, %v530
      %v553 = vsel %vm540, -1e+09, %v531
      %v554 = vsel %vm540, -1e+09, %v532
      %v555 = vsel %vm540, -1e+09, %v533
      %v556 = vsel %vm540, -1e+09, %v534
      %v557 = vld [vmem:[#allocation2] sm:$0xff]
      %v558 = vld [vmem:[#allocation2 + $0x8] sm:$0xff]
      %v559 = vld [vmem:[#allocation2 + $0x10] sm:$0xff]
      %v560 = vld [vmem:[#allocation2 + $0x18] sm:$0xff]
      %v561 = vld [vmem:[#allocation2 + $0x20] sm:$0xff]
      %v562 = vld [vmem:[#allocation2 + $0x28] sm:$0xff]
      %v563 = vld [vmem:[#allocation2 + $0x30] sm:$0xff]
      %v564 = vld [vmem:[#allocation2 + $0x38] sm:$0xff]
      %v565 = vld [vmem:[#allocation2 + $0x40] sm:$0xff]
      %v566 = vld [vmem:[#allocation2 + $0x48] sm:$0xff]
      %v567 = vld [vmem:[#allocation2 + $0x50] sm:$0xff]
      %v568 = vld [vmem:[#allocation2 + $0x58] sm:$0xff]
      %v569 = vld [vmem:[#allocation2 + $0x60] sm:$0xff]
      %v570 = vld [vmem:[#allocation2 + $0x68] sm:$0xff]
      %v571 = vld [vmem:[#allocation2 + $0x70] sm:$0xff]
      %v572 = vld [vmem:[#allocation2 + $0x78] sm:$0xff]
      %573 = vmax.xlane.f32.xlu0 %v541
      %v574 = vpop.xlane.xlu0 %573
      %575 = vmax.xlane.f32.xlu0 %v542
      %v576 = vpop.xlane.xlu0 %575
      %577 = vmax.xlane.f32.xlu0 %v543
      %v578 = vpop.xlane.xlu0 %577
      %579 = vmax.xlane.f32.xlu0 %v544
      %v580 = vpop.xlane.xlu0 %579
      %581 = vmax.xlane.f32.xlu0 %v545
      %v582 = vpop.xlane.xlu0 %581
      %583 = vmax.xlane.f32.xlu0 %v546
      %v584 = vpop.xlane.xlu0 %583
      %585 = vmax.xlane.f32.xlu0 %v547
      %v586 = vpop.xlane.xlu0 %585
      %587 = vmax.xlane.f32.xlu0 %v548
      %v588 = vpop.xlane.xlu0 %587
      %589 = vmax.xlane.f32.xlu0 %v549
      %v590 = vpop.xlane.xlu0 %589
      %591 = vmax.xlane.f32.xlu0 %v550
      %v592 = vpop.xlane.xlu0 %591
      %593 = vmax.xlane.f32.xlu0 %v551
      %v594 = vpop.xlane.xlu0 %593
      %595 = vmax.xlane.f32.xlu0 %v552
      %v596 = vpop.xlane.xlu0 %595
      %597 = vmax.xlane.f32.xlu0 %v553
      %v598 = vpop.xlane.xlu0 %597
      %599 = vmax.xlane.f32.xlu0 %v554
      %v600 = vpop.xlane.xlu0 %599
      %601 = vmax.xlane.f32.xlu0 %v555
      %v602 = vpop.xlane.xlu0 %601
      %603 = vmax.xlane.f32.xlu0 %v556
      %v604 = vpop.xlane.xlu0 %603
      %v605 = vmax.f32 %v557, %v574
      %v606 = vmax.f32 %v558, %v576
      %v607 = vmax.f32 %v559, %v578
      %v608 = vmax.f32 %v560, %v580
      %v609 = vmax.f32 %v561, %v582
      %v610 = vmax.f32 %v562, %v584
      %v611 = vmax.f32 %v563, %v586
      %v612 = vmax.f32 %v564, %v588
      %v613 = vmax.f32 %v565, %v590
      %v614 = vmax.f32 %v566, %v592
      %v615 = vmax.f32 %v567, %v594
      %v616 = vmax.f32 %v568, %v596
      %v617 = vmax.f32 %v569, %v598
      %v618 = vmax.f32 %v570, %v600
      %v619 = vmax.f32 %v571, %v602
      %v620 = vmax.f32 %v572, %v604
      %v621 = vsub.f32 %v557, %v605
      %v622 = vsub.f32 %v558, %v606
      %v623 = vsub.f32 %v559, %v607
      %v624 = vsub.f32 %v560, %v608
      %v625 = vsub.f32 %v561, %v609
      %v626 = vsub.f32 %v562, %v610
      %v627 = vsub.f32 %v563, %v611
      %v628 = vsub.f32 %v564, %v612
      %v629 = vsub.f32 %v565, %v613
      %v630 = vsub.f32 %v566, %v614
      %v631 = vsub.f32 %v567, %v615
      %v632 = vsub.f32 %v568, %v616
      %v633 = vsub.f32 %v569, %v617
      %v634 = vsub.f32 %v570, %v618
      %v635 = vsub.f32 %v571, %v619
      %v636 = vsub.f32 %v572, %v620
      %v637 = vmul.f32 %v621, 1.442695
      %v638 = vpow.pop %v637
      %v639 = vmul.f32 %v622, 1.442695
      %v640 = vpow.pop %v639
      %v641 = vmul.f32 %v623, 1.442695
      %v642 = vpow.pop %v641
      %v643 = vmul.f32 %v624, 1.442695
      %v644 = vpow.pop %v643
      %v645 = vmul.f32 %v625, 1.442695
      %v646 = vpow.pop %v645
      %v647 = vmul.f32 %v626, 1.442695
      %v648 = vpow.pop %v647
      %v649 = vmul.f32 %v627, 1.442695
      %v650 = vpow.pop %v649
      %v651 = vmul.f32 %v628, 1.442695
      %v652 = vpow.pop %v651
      %v653 = vmul.f32 %v629, 1.442695
      %v654 = vpow.pop %v653
      %v655 = vmul.f32 %v630, 1.442695
      %v656 = vpow.pop %v655
      %v657 = vmul.f32 %v631, 1.442695
      %v658 = vpow.pop %v657
      %v659 = vmul.f32 %v632, 1.442695
      %v660 = vpow.pop %v659
      %v661 = vmul.f32 %v633, 1.442695
      %v662 = vpow.pop %v661
      %v663 = vmul.f32 %v634, 1.442695
      %v664 = vpow.pop %v663
      %v665 = vmul.f32 %v635, 1.442695
      %v666 = vpow.pop %v665
      %v667 = vmul.f32 %v636, 1.442695
      %v668 = vpow.pop %v667
      %670 = vset.pattern.permute.xlu0 0
      %671 = vperm.xlu0 %670, %v605
      %v672 = vpop.permute.xlu0 %671
      %675 = vset.pattern.permute.xlu0 0
      %676 = vperm.xlu0 %675, %v606
      %v677 = vpop.permute.xlu0 %676
      %680 = vset.pattern.permute.xlu0 0
      %681 = vperm.xlu0 %680, %v607
      %v682 = vpop.permute.xlu0 %681
      %685 = vset.pattern.permute.xlu0 0
      %686 = vperm.xlu0 %685, %v608
      %v687 = vpop.permute.xlu0 %686
      %690 = vset.pattern.permute.xlu0 0
      %691 = vperm.xlu0 %690, %v609
      %v692 = vpop.permute.xlu0 %691
      %695 = vset.pattern.permute.xlu0 0
      %696 = vperm.xlu0 %695, %v610
      %v697 = vpop.permute.xlu0 %696
      %700 = vset.pattern.permute.xlu0 0
      %701 = vperm.xlu0 %700, %v611
      %v702 = vpop.permute.xlu0 %701
      %705 = vset.pattern.permute.xlu0 0
      %706 = vperm.xlu0 %705, %v612
      %v707 = vpop.permute.xlu0 %706
      %710 = vset.pattern.permute.xlu0 0
      %711 = vperm.xlu0 %710, %v613
      %v712 = vpop.permute.xlu0 %711
      %715 = vset.pattern.permute.xlu0 0
      %716 = vperm.xlu0 %715, %v614
      %v717 = vpop.permute.xlu0 %716
      %720 = vset.pattern.permute.xlu0 0
      %721 = vperm.xlu0 %720, %v615
      %v722 = vpop.permute.xlu0 %721
      %725 = vset.pattern.permute.xlu0 0
      %726 = vperm.xlu0 %725, %v616
      %v727 = vpop.permute.xlu0 %726
      %730 = vset.pattern.permute.xlu0 0
      %731 = vperm.xlu0 %730, %v617
      %v732 = vpop.permute.xlu0 %731
      %735 = vset.pattern.permute.xlu0 0
      %736 = vperm.xlu0 %735, %v618
      %v737 = vpop.permute.xlu0 %736
      %740 = vset.pattern.permute.xlu0 0
      %741 = vperm.xlu0 %740, %v619
      %v742 = vpop.permute.xlu0 %741
      %745 = vset.pattern.permute.xlu0 0
      %746 = vperm.xlu0 %745, %v620
      %v747 = vpop.permute.xlu0 %746
      %v749 = vsub.f32 %v541, %v672
      %v750 = vsub.f32 %v542, %v677
      %v751 = vsub.f32 %v543, %v682
      %v752 = vsub.f32 %v544, %v687
      %v753 = vsub.f32 %v545, %v692
      %v754 = vsub.f32 %v546, %v697
      %v755 = vsub.f32 %v547, %v702
      %v756 = vsub.f32 %v548, %v707
      %v757 = vsub.f32 %v549, %v712
      %v758 = vsub.f32 %v550, %v717
      %v759 = vsub.f32 %v551, %v722
      %v760 = vsub.f32 %v552, %v727
      %v761 = vsub.f32 %v553, %v732
      %v762 = vsub.f32 %v554, %v737
      %v763 = vsub.f32 %v555, %v742
      %v764 = vsub.f32 %v556, %v747
      %v765 = vmul.f32 %v749, 1.442695
      %v766 = vpow.pop %v765
      %v767 = vmul.f32 %v750, 1.442695
      %v768 = vpow.pop %v767
      %v769 = vmul.f32 %v751, 1.442695
      %v770 = vpow.pop %v769
      %v771 = vmul.f32 %v752, 1.442695
      %v772 = vpow.pop %v771
      %v773 = vmul.f32 %v753, 1.442695
      %v774 = vpow.pop %v773
      %v775 = vmul.f32 %v754, 1.442695
      %v776 = vpow.pop %v775
      %v777 = vmul.f32 %v755, 1.442695
      %v778 = vpow.pop %v777
      %v779 = vmul.f32 %v756, 1.442695
      %v780 = vpow.pop %v779
      %v781 = vmul.f32 %v757, 1.442695
      %v782 = vpow.pop %v781
      %v783 = vmul.f32 %v758, 1.442695
      %v784 = vpow.pop %v783
      %v785 = vmul.f32 %v759, 1.442695
      %v786 = vpow.pop %v785
      %v787 = vmul.f32 %v760, 1.442695
      %v788 = vpow.pop %v787
      %v789 = vmul.f32 %v761, 1.442695
      %v790 = vpow.pop %v789
      %v791 = vmul.f32 %v762, 1.442695
      %v792 = vpow.pop %v791
      %v793 = vmul.f32 %v763, 1.442695
      %v794 = vpow.pop %v793
      %v795 = vmul.f32 %v764, 1.442695
      %v796 = vpow.pop %v795
      %v797 = vld [vmem:[#allocation3] sm:$0xff]
      %v798 = vld [vmem:[#allocation3 + $0x8] sm:$0xff]
      %v799 = vld [vmem:[#allocation3 + $0x10] sm:$0xff]
      %v800 = vld [vmem:[#allocation3 + $0x18] sm:$0xff]
      %v801 = vld [vmem:[#allocation3 + $0x20] sm:$0xff]
      %v802 = vld [vmem:[#allocation3 + $0x28] sm:$0xff]
      %v803 = vld [vmem:[#allocation3 + $0x30] sm:$0xff]
      %v804 = vld [vmem:[#allocation3 + $0x38] sm:$0xff]
      %v805 = vld [vmem:[#allocation3 + $0x40] sm:$0xff]
      %v806 = vld [vmem:[#allocation3 + $0x48] sm:$0xff]
      %v807 = vld [vmem:[#allocation3 + $0x50] sm:$0xff]
      %v808 = vld [vmem:[#allocation3 + $0x58] sm:$0xff]
      %v809 = vld [vmem:[#allocation3 + $0x60] sm:$0xff]
      %v810 = vld [vmem:[#allocation3 + $0x68] sm:$0xff]
      %v811 = vld [vmem:[#allocation3 + $0x70] sm:$0xff]
      %v812 = vld [vmem:[#allocation3 + $0x78] sm:$0xff]
      %v813 = vmul.f32 %v638, %v797
      %v814 = vmul.f32 %v640, %v798
      %v815 = vmul.f32 %v642, %v799
      %v816 = vmul.f32 %v644, %v800
      %v817 = vmul.f32 %v646, %v801
      %v818 = vmul.f32 %v648, %v802
      %v819 = vmul.f32 %v650, %v803
      %v820 = vmul.f32 %v652, %v804
      %v821 = vmul.f32 %v654, %v805
      %v822 = vmul.f32 %v656, %v806
      %v823 = vmul.f32 %v658, %v807
      %v824 = vmul.f32 %v660, %v808
      %v825 = vmul.f32 %v662, %v809
      %v826 = vmul.f32 %v664, %v810
      %v827 = vmul.f32 %v666, %v811
      %v828 = vmul.f32 %v668, %v812
      %829 = vadd.xlane.f32.xlu0 %v766
      %v830 = vpop.xlane.xlu0 %829
      %831 = vadd.xlane.f32.xlu0 %v768
      %v832 = vpop.xlane.xlu0 %831
      %833 = vadd.xlane.f32.xlu0 %v770
      %v834 = vpop.xlane.xlu0 %833
      %835 = vadd.xlane.f32.xlu0 %v772
      %v836 = vpop.xlane.xlu0 %835
      %837 = vadd.xlane.f32.xlu0 %v774
      %v838 = vpop.xlane.xlu0 %837
      %839 = vadd.xlane.f32.xlu0 %v776
      %v840 = vpop.xlane.xlu0 %839
      %841 = vadd.xlane.f32.xlu0 %v778
      %v842 = vpop.xlane.xlu0 %841
      %843 = vadd.xlane.f32.xlu0 %v780
      %v844 = vpop.xlane.xlu0 %843
      %845 = vadd.xlane.f32.xlu0 %v782
      %v846 = vpop.xlane.xlu0 %845
      %847 = vadd.xlane.f32.xlu0 %v784
      %v848 = vpop.xlane.xlu0 %847
      %849 = vadd.xlane.f32.xlu0 %v786
      %v850 = vpop.xlane.xlu0 %849
      %851 = vadd.xlane.f32.xlu0 %v788
      %v852 = vpop.xlane.xlu0 %851
      %853 = vadd.xlane.f32.xlu0 %v790
      %v854 = vpop.xlane.xlu0 %853
      %855 = vadd.xlane.f32.xlu0 %v792
      %v856 = vpop.xlane.xlu0 %855
      %857 = vadd.xlane.f32.xlu0 %v794
      %v858 = vpop.xlane.xlu0 %857
      %859 = vadd.xlane.f32.xlu0 %v796
      %v860 = vpop.xlane.xlu0 %859
      %v861 = vadd.f32 %v813, %v830
      %v862 = vadd.f32 %v814, %v832
      %v863 = vadd.f32 %v815, %v834
      %v864 = vadd.f32 %v816, %v836
      %v865 = vadd.f32 %v817, %v838
      %v866 = vadd.f32 %v818, %v840
      %v867 = vadd.f32 %v819, %v842
      %v868 = vadd.f32 %v820, %v844
      %v869 = vadd.f32 %v821, %v846
      %v870 = vadd.f32 %v822, %v848
      %v871 = vadd.f32 %v823, %v850
      %v872 = vadd.f32 %v824, %v852
      %v873 = vadd.f32 %v825, %v854
      %v874 = vadd.f32 %v826, %v856
      %v875 = vadd.f32 %v827, %v858
      %v876 = vadd.f32 %v828, %v860
      %vm877 = vcmask 7168
      %878 = vst.msk [vmem:[#allocation3] sm:$0xff] %vm877, %v861
      %879 = vst.msk [vmem:[#allocation3 + $0x8] sm:$0xff] %vm877, %v862
      %880 = vst.msk [vmem:[#allocation3 + $0x10] sm:$0xff] %vm877, %v863
      %881 = vst.msk [vmem:[#allocation3 + $0x18] sm:$0xff] %vm877, %v864
      %882 = vst.msk [vmem:[#allocation3 + $0x20] sm:$0xff] %vm877, %v865
      %883 = vst.msk [vmem:[#allocation3 + $0x28] sm:$0xff] %vm877, %v866
      %884 = vst.msk [vmem:[#allocation3 + $0x30] sm:$0xff] %vm877, %v867
      %885 = vst.msk [vmem:[#allocation3 + $0x38] sm:$0xff] %vm877, %v868
      %886 = vst.msk [vmem:[#allocation3 + $0x40] sm:$0xff] %vm877, %v869
      %887 = vst.msk [vmem:[#allocation3 + $0x48] sm:$0xff] %vm877, %v870
      %888 = vst.msk [vmem:[#allocation3 + $0x50] sm:$0xff] %vm877, %v871
      %889 = vst.msk [vmem:[#allocation3 + $0x58] sm:$0xff] %vm877, %v872
      %890 = vst.msk [vmem:[#allocation3 + $0x60] sm:$0xff] %vm877, %v873
      %891 = vst.msk [vmem:[#allocation3 + $0x68] sm:$0xff] %vm877, %v874
      %892 = vst.msk [vmem:[#allocation3 + $0x70] sm:$0xff] %vm877, %v875
      %893 = vst.msk [vmem:[#allocation3 + $0x78] sm:$0xff] %vm877, %v876
      %v894 = vld [vmem:[#allocation4] sm:$0xff]
      %v895 = vld [vmem:[#allocation4 + $0x8] sm:$0xff]
      %v896 = vld [vmem:[#allocation4 + $0x10] sm:$0xff]
      %v897 = vld [vmem:[#allocation4 + $0x18] sm:$0xff]
      %v898 = vld [vmem:[#allocation4 + $0x20] sm:$0xff]
      %v899 = vld [vmem:[#allocation4 + $0x28] sm:$0xff]
      %v900 = vld [vmem:[#allocation4 + $0x30] sm:$0xff]
      %v901 = vld [vmem:[#allocation4 + $0x38] sm:$0xff]
      %v902 = vld [vmem:[#allocation4 + $0x40] sm:$0xff]
      %v903 = vld [vmem:[#allocation4 + $0x48] sm:$0xff]
      %v904 = vld [vmem:[#allocation4 + $0x50] sm:$0xff]
      %v905 = vld [vmem:[#allocation4 + $0x58] sm:$0xff]
      %v906 = vld [vmem:[#allocation4 + $0x60] sm:$0xff]
      %v907 = vld [vmem:[#allocation4 + $0x68] sm:$0xff]
      %v908 = vld [vmem:[#allocation4 + $0x70] sm:$0xff]
      %v909 = vld [vmem:[#allocation4 + $0x78] sm:$0xff]
      %911 = vset.pattern.permute.xlu0 0
      %912 = vperm.xlu0 %911, %v638
      %v913 = vpop.permute.xlu0 %912
      %916 = vset.pattern.permute.xlu0 0
      %917 = vperm.xlu0 %916, %v640
      %v918 = vpop.permute.xlu0 %917
      %921 = vset.pattern.permute.xlu0 0
      %922 = vperm.xlu0 %921, %v642
      %v923 = vpop.permute.xlu0 %922
      %926 = vset.pattern.permute.xlu0 0
      %927 = vperm.xlu0 %926, %v644
      %v928 = vpop.permute.xlu0 %927
      %931 = vset.pattern.permute.xlu0 0
      %932 = vperm.xlu0 %931, %v646
      %v933 = vpop.permute.xlu0 %932
      %936 = vset.pattern.permute.xlu0 0
      %937 = vperm.xlu0 %936, %v648
      %v938 = vpop.permute.xlu0 %937
      %941 = vset.pattern.permute.xlu0 0
      %942 = vperm.xlu0 %941, %v650
      %v943 = vpop.permute.xlu0 %942
      %946 = vset.pattern.permute.xlu0 0
      %947 = vperm.xlu0 %946, %v652
      %v948 = vpop.permute.xlu0 %947
      %951 = vset.pattern.permute.xlu0 0
      %952 = vperm.xlu0 %951, %v654
      %v953 = vpop.permute.xlu0 %952
      %956 = vset.pattern.permute.xlu0 0
      %957 = vperm.xlu0 %956, %v656
      %v958 = vpop.permute.xlu0 %957
      %961 = vset.pattern.permute.xlu0 0
      %962 = vperm.xlu0 %961, %v658
      %v963 = vpop.permute.xlu0 %962
      %966 = vset.pattern.permute.xlu0 0
      %967 = vperm.xlu0 %966, %v660
      %v968 = vpop.permute.xlu0 %967
      %971 = vset.pattern.permute.xlu0 0
      %972 = vperm.xlu0 %971, %v662
      %v973 = vpop.permute.xlu0 %972
      %976 = vset.pattern.permute.xlu0 0
      %977 = vperm.xlu0 %976, %v664
      %v978 = vpop.permute.xlu0 %977
      %981 = vset.pattern.permute.xlu0 0
      %982 = vperm.xlu0 %981, %v666
      %v983 = vpop.permute.xlu0 %982
      %986 = vset.pattern.permute.xlu0 0
      %987 = vperm.xlu0 %986, %v668
      %v988 = vpop.permute.xlu0 %987
      %v990 = vmul.f32 %v913, %v894
      %v991 = vmul.f32 %v918, %v895
      %v992 = vmul.f32 %v923, %v896
      %v993 = vmul.f32 %v928, %v897
      %v994 = vmul.f32 %v933, %v898
      %v995 = vmul.f32 %v938, %v899
      %v996 = vmul.f32 %v943, %v900
      %v997 = vmul.f32 %v948, %v901
      %v998 = vmul.f32 %v953, %v902
      %v999 = vmul.f32 %v958, %v903
      %v1000 = vmul.f32 %v963, %v904
      %v1001 = vmul.f32 %v968, %v905
      %v1002 = vmul.f32 %v973, %v906
      %v1003 = vmul.f32 %v978, %v907
      %v1004 = vmul.f32 %v983, %v908
      %v1005 = vmul.f32 %v988, %v909
      %v1006 = vld [vmem:[%s277] sm:$0xff]
      %v1007 = vld [vmem:[%s277 + $0x8] sm:$0xff]
      %v1008 = vld [vmem:[%s277 + $0x10] sm:$0xff]
      %v1009 = vld [vmem:[%s277 + $0x18] sm:$0xff]
      %v1010 = vld [vmem:[%s277 + $0x20] sm:$0xff]
      %v1011 = vld [vmem:[%s277 + $0x28] sm:$0xff]
      %v1012 = vld [vmem:[%s277 + $0x30] sm:$0xff]
      %v1013 = vld [vmem:[%s277 + $0x38] sm:$0xff]
      %v1014 = vld [vmem:[%s277 + $0x40] sm:$0xff]
      %v1015 = vld [vmem:[%s277 + $0x48] sm:$0xff]
      %v1016 = vld [vmem:[%s277 + $0x50] sm:$0xff]
      %v1017 = vld [vmem:[%s277 + $0x58] sm:$0xff]
      %v1018 = vld [vmem:[%s277 + $0x60] sm:$0xff]
      %v1019 = vld [vmem:[%s277 + $0x68] sm:$0xff]
      %v1020 = vld [vmem:[%s277 + $0x70] sm:$0xff]
      %v1021 = vld [vmem:[%s277 + $0x78] sm:$0xff]
      %1022 = vmatprep.subr.mxu0 0.0
      %1023 = vmatpush1.msra.mxu0 %v1006
      %1024 = vmatprep.subr.mxu0 0.0
      %1025 = vmatpush1.msra.mxu0 %v1007
      %1026 = vmatprep.subr.mxu0 0.0
      %1027 = vmatpush1.msra.mxu0 %v1008
      %1028 = vmatprep.subr.mxu0 0.0
      %1029 = vmatpush1.msra.mxu0 %v1009
      %1030 = vmatprep.subr.mxu0 0.0
      %1031 = vmatpush1.msra.mxu0 %v1010
      %1032 = vmatprep.subr.mxu0 0.0
      %1033 = vmatpush1.msra.mxu0 %v1011
      %1034 = vmatprep.subr.mxu0 0.0
      %1035 = vmatpush1.msra.mxu0 %v1012
      %1036 = vmatprep.subr.mxu0 0.0
      %1037 = vmatpush1.msra.mxu0 %v1013
      %1038 = vmatprep.subr.mxu0 0.0
      %1039 = vmatpush1.msra.mxu0 %v1014
      %1040 = vmatprep.subr.mxu0 0.0
      %1041 = vmatpush1.msra.mxu0 %v1015
      %1042 = vmatprep.subr.mxu0 0.0
      %1043 = vmatpush1.msra.mxu0 %v1016
      %1044 = vmatprep.subr.mxu0 0.0
      %1045 = vmatpush1.msra.mxu0 %v1017
      %1046 = vmatprep.subr.mxu0 0.0
      %1047 = vmatpush1.msra.mxu0 %v1018
      %1048 = vmatprep.subr.mxu0 0.0
      %1049 = vmatpush1.msra.mxu0 %v1019
      %1050 = vmatprep.subr.mxu0 0.0
      %1051 = vmatpush1.msra.mxu0 %v1020
      %1052 = vmatprep.subr.mxu0 0.0
      %1053 = vmatpush1.msra.mxu0 %v1021
      %1054 = vmatprep.subr.mxu0 0.0
      %1055 = vmatpush1.msra.mxu0 0.0
      %1056 = vmatprep.subr.mxu0 0.0
      %1057 = vmatpush1.msra.mxu0 0.0
      %1058 = vmatprep.subr.mxu0 0.0
      %1059 = vmatpush1.msra.mxu0 0.0
      %1060 = vmatprep.subr.mxu0 0.0
      %1061 = vmatpush1.msra.mxu0 0.0
      %1062 = vmatprep.subr.mxu0 0.0
      %1063 = vmatpush1.msra.mxu0 0.0
      %1064 = vmatprep.subr.mxu0 0.0
      %1065 = vmatpush1.msra.mxu0 0.0
      %1066 = vmatprep.subr.mxu0 0.0
      %1067 = vmatpush1.msra.mxu0 0.0
      %1068 = vmatprep.subr.mxu0 0.0
      %1069 = vmatpush1.msra.mxu0 0.0
      %1070 = vmatprep.subr.mxu0 0.0
      %1071 = vmatpush1.msra.mxu0 0.0
      %1072 = vmatprep.subr.mxu0 0.0
      %1073 = vmatpush1.msra.mxu0 0.0
      %1074 = vmatprep.subr.mxu0 0.0
      %1075 = vmatpush1.msra.mxu0 0.0
      %1076 = vmatprep.subr.mxu0 0.0
      %1077 = vmatpush1.msra.mxu0 0.0
      %1078 = vmatprep.subr.mxu0 0.0
      %1079 = vmatpush1.msra.mxu0 0.0
      %1080 = vmatprep.subr.mxu0 0.0
      %1081 = vmatpush1.msra.mxu0 0.0
      %1082 = vmatprep.subr.mxu0 0.0
      %1083 = vmatpush1.msra.mxu0 0.0
      %1084 = vmatprep.subr.mxu0 0.0
      %1085 = vmatpush1.msra.mxu0 0.0
      %1086 = vmatprep.mubr.f32.mxu0 0.0
      %1087 = vmatmul.mubr.f32.gmra.mrb[0].mxu0 %v766
      %v1088 = vpop.f32.mrb[0].mxu0
      %v1089 = vadd.f32 0.0, %v1088
      %v1090 = vpop.f32.mrb[0].mxu0
      %1091 = vmatprep.mubr.f32.mxu0 0.0
      %1092 = vmatmul.mubr.f32.gmra.mrb[0].mxu0 %v768
      %v1093 = vpop.f32.mrb[0].mxu0
      %v1094 = vadd.f32 0.0, %v1093
      %v1095 = vpop.f32.mrb[0].mxu0
      %1096 = vmatprep.mubr.f32.mxu0 0.0
      %1097 = vmatmul.mubr.f32.gmra.mrb[0].mxu0 %v770
      %v1098 = vpop.f32.mrb[0].mxu0
      %v1099 = vadd.f32 0.0, %v1098
      %v1100 = vpop.f32.mrb[0].mxu0
      %1101 = vmatprep.mubr.f32.mxu0 0.0
      %1102 = vmatmul.mubr.f32.gmra.mrb[0].mxu0 %v772
      %v1103 = vpop.f32.mrb[0].mxu0
      %v1104 = vadd.f32 0.0, %v1103
      %v1105 = vpop.f32.mrb[0].mxu0
      %1106 = vmatprep.mubr.f32.mxu0 0.0
      %1107 = vmatmul.mubr.f32.gmra.mrb[0].mxu0 %v774
      %v1108 = vpop.f32.mrb[0].mxu0
      %v1109 = vadd.f32 0.0, %v1108
      %v1110 = vpop.f32.mrb[0].mxu0
      %1111 = vmatprep.mubr.f32.mxu0 0.0
      %1112 = vmatmul.mubr.f32.gmra.mrb[0].mxu0 %v776
      %v1113 = vpop.f32.mrb[0].mxu0
      %v1114 = vadd.f32 0.0, %v1113
      %v1115 = vpop.f32.mrb[0].mxu0
      %1116 = vmatprep.mubr.f32.mxu0 0.0
      %1117 = vmatmul.mubr.f32.gmra.mrb[0].mxu0 %v778
      %v1118 = vpop.f32.mrb[0].mxu0
      %v1119 = vadd.f32 0.0, %v1118
      %v1120 = vpop.f32.mrb[0].mxu0
      %1121 = vmatprep.mubr.f32.mxu0 0.0
      %1122 = vmatmul.mubr.f32.gmra.mrb[0].mxu0 %v780
      %v1123 = vpop.f32.mrb[0].mxu0
      %v1124 = vadd.f32 0.0, %v1123
      %v1125 = vpop.f32.mrb[0].mxu0
      %1126 = vmatprep.mubr.f32.mxu0 0.0
      %1127 = vmatmul.mubr.f32.gmra.mrb[0].mxu0 %v782
      %v1128 = vpop.f32.mrb[0].mxu0
      %v1129 = vadd.f32 0.0, %v1128
      %v1130 = vpop.f32.mrb[0].mxu0
      %1131 = vmatprep.mubr.f32.mxu0 0.0
      %1132 = vmatmul.mubr.f32.gmra.mrb[0].mxu0 %v784
      %v1133 = vpop.f32.mrb[0].mxu0
      %v1134 = vadd.f32 0.0, %v1133
      %v1135 = vpop.f32.mrb[0].mxu0
      %1136 = vmatprep.mubr.f32.mxu0 0.0
      %1137 = vmatmul.mubr.f32.gmra.mrb[0].mxu0 %v786
      %v1138 = vpop.f32.mrb[0].mxu0
      %v1139 = vadd.f32 0.0, %v1138
      %v1140 = vpop.f32.mrb[0].mxu0
      %1141 = vmatprep.mubr.f32.mxu0 0.0
      %1142 = vmatmul.mubr.f32.gmra.mrb[0].mxu0 %v788
      %v1143 = vpop.f32.mrb[0].mxu0
      %v1144 = vadd.f32 0.0, %v1143
      %v1145 = vpop.f32.mrb[0].mxu0
      %1146 = vmatprep.mubr.f32.mxu0 0.0
      %1147 = vmatmul.mubr.f32.gmra.mrb[0].mxu0 %v790
      %v1148 = vpop.f32.mrb[0].mxu0
      %v1149 = vadd.f32 0.0, %v1148
      %v1150 = vpop.f32.mrb[0].mxu0
      %1151 = vmatprep.mubr.f32.mxu0 0.0
      %1152 = vmatmul.mubr.f32.gmra.mrb[0].mxu0 %v792
      %v1153 = vpop.f32.mrb[0].mxu0
      %v1154 = vadd.f32 0.0, %v1153
      %v1155 = vpop.f32.mrb[0].mxu0
      %1156 = vmatprep.mubr.f32.mxu0 0.0
      %1157 = vmatmul.mubr.f32.gmra.mrb[0].mxu0 %v794
      %v1158 = vpop.f32.mrb[0].mxu0
      %v1159 = vadd.f32 0.0, %v1158
      %v1160 = vpop.f32.mrb[0].mxu0
      %1161 = vmatprep.mubr.f32.mxu0 0.0
      %1162 = vmatmul.mubr.f32.gmra.mrb[0].mxu0 %v796
      %v1163 = vpop.f32.mrb[0].mxu0
      %v1164 = vadd.f32 0.0, %v1163
      %v1165 = vpop.f32.mrb[0].mxu0
      %1166 = vdwg.mxu0
      %v1167 = vadd.f32 %v990, %v1089
      %v1168 = vadd.f32 %v991, %v1094
      %v1169 = vadd.f32 %v992, %v1099
      %v1170 = vadd.f32 %v993, %v1104
      %v1171 = vadd.f32 %v994, %v1109
      %v1172 = vadd.f32 %v995, %v1114
      %v1173 = vadd.f32 %v996, %v1119
      %v1174 = vadd.f32 %v997, %v1124
      %v1175 = vadd.f32 %v998, %v1129
      %v1176 = vadd.f32 %v999, %v1134
      %v1177 = vadd.f32 %v1000, %v1139
      %v1178 = vadd.f32 %v1001, %v1144
      %v1179 = vadd.f32 %v1002, %v1149
      %v1180 = vadd.f32 %v1003, %v1154
      %v1181 = vadd.f32 %v1004, %v1159
      %v1182 = vadd.f32 %v1005, %v1164
      %1183 = vst [vmem:[#allocation4] sm:$0xff] %v1167
      %1184 = vst [vmem:[#allocation4 + $0x8] sm:$0xff] %v1168
      %1185 = vst [vmem:[#allocation4 + $0x10] sm:$0xff] %v1169
      %1186 = vst [vmem:[#allocation4 + $0x18] sm:$0xff] %v1170
      %1187 = vst [vmem:[#allocation4 + $0x20] sm:$0xff] %v1171
      %1188 = vst [vmem:[#allocation4 + $0x28] sm:$0xff] %v1172
      %1189 = vst [vmem:[#allocation4 + $0x30] sm:$0xff] %v1173
      %1190 = vst [vmem:[#allocation4 + $0x38] sm:$0xff] %v1174
      %1191 = vst [vmem:[#allocation4 + $0x40] sm:$0xff] %v1175
      %1192 = vst [vmem:[#allocation4 + $0x48] sm:$0xff] %v1176
      %1193 = vst [vmem:[#allocation4 + $0x50] sm:$0xff] %v1177
      %1194 = vst [vmem:[#allocation4 + $0x58] sm:$0xff] %v1178
      %1195 = vst [vmem:[#allocation4 + $0x60] sm:$0xff] %v1179
      %1196 = vst [vmem:[#allocation4 + $0x68] sm:$0xff] %v1180
      %1197 = vst [vmem:[#allocation4 + $0x70] sm:$0xff] %v1181
      %1198 = vst [vmem:[#allocation4 + $0x78] sm:$0xff] %v1182
      %1199 = vst.msk [vmem:[#allocation2] sm:$0xff] %vm877, %v605
      %1200 = vst.msk [vmem:[#allocation2 + $0x8] sm:$0xff] %vm877, %v606
      %1201 = vst.msk [vmem:[#allocation2 + $0x10] sm:$0xff] %vm877, %v607
      %1202 = vst.msk [vmem:[#allocation2 + $0x18] sm:$0xff] %vm877, %v608
      %1203 = vst.msk [vmem:[#allocation2 + $0x20] sm:$0xff] %vm877, %v609
      %1204 = vst.msk [vmem:[#allocation2 + $0x28] sm:$0xff] %vm877, %v610
      %1205 = vst.msk [vmem:[#allocation2 + $0x30] sm:$0xff] %vm877, %v611
      %1206 = vst.msk [vmem:[#allocation2 + $0x38] sm:$0xff] %vm877, %v612
      %1207 = vst.msk [vmem:[#allocation2 + $0x40] sm:$0xff] %vm877, %v613
      %1208 = vst.msk [vmem:[#allocation2 + $0x48] sm:$0xff] %vm877, %v614
      %1209 = vst.msk [vmem:[#allocation2 + $0x50] sm:$0xff] %vm877, %v615
      %1210 = vst.msk [vmem:[#allocation2 + $0x58] sm:$0xff] %vm877, %v616
      %1211 = vst.msk [vmem:[#allocation2 + $0x60] sm:$0xff] %vm877, %v617
      %1212 = vst.msk [vmem:[#allocation2 + $0x68] sm:$0xff] %vm877, %v618
      %1213 = vst.msk [vmem:[#allocation2 + $0x70] sm:$0xff] %vm877, %v619
      %1214 = vst.msk [vmem:[#allocation2 + $0x78] sm:$0xff] %vm877, %v620
      // Predicated region
      $region37: #{multi_head2.8} parent=31 // pred_check
        %p1215 = pneg %p289
      $region38: #{multi_head2.8} parent=31 // pred_check_branch
        %1217 = sbr.rel (%p1215) target = $region40
      $region39: #{multi_head2.8} parent=31 // pred_region
        %v1218 = vld [vmem:[#allocation4] sm:$0xff]
        %v1219 = vld [vmem:[#allocation4 + $0x8] sm:$0xff]
        %v1220 = vld [vmem:[#allocation4 + $0x10] sm:$0xff]
        %v1221 = vld [vmem:[#allocation4 + $0x18] sm:$0xff]
        %v1222 = vld [vmem:[#allocation4 + $0x20] sm:$0xff]
        %v1223 = vld [vmem:[#allocation4 + $0x28] sm:$0xff]
        %v1224 = vld [vmem:[#allocation4 + $0x30] sm:$0xff]
        %v1225 = vld [vmem:[#allocation4 + $0x38] sm:$0xff]
        %v1226 = vld [vmem:[#allocation4 + $0x40] sm:$0xff]
        %v1227 = vld [vmem:[#allocation4 + $0x48] sm:$0xff]
        %v1228 = vld [vmem:[#allocation4 + $0x50] sm:$0xff]
        %v1229 = vld [vmem:[#allocation4 + $0x58] sm:$0xff]
        %v1230 = vld [vmem:[#allocation4 + $0x60] sm:$0xff]
        %v1231 = vld [vmem:[#allocation4 + $0x68] sm:$0xff]
        %v1232 = vld [vmem:[#allocation4 + $0x70] sm:$0xff]
        %v1233 = vld [vmem:[#allocation4 + $0x78] sm:$0xff]
        %v1234 = vld [vmem:[#allocation3] sm:$0xff]
        %v1235 = vld [vmem:[#allocation3 + $0x8] sm:$0xff]
        %v1236 = vld [vmem:[#allocation3 + $0x10] sm:$0xff]
        %v1237 = vld [vmem:[#allocation3 + $0x18] sm:$0xff]
        %v1238 = vld [vmem:[#allocation3 + $0x20] sm:$0xff]
        %v1239 = vld [vmem:[#allocation3 + $0x28] sm:$0xff]
        %v1240 = vld [vmem:[#allocation3 + $0x30] sm:$0xff]
        %v1241 = vld [vmem:[#allocation3 + $0x38] sm:$0xff]
        %v1242 = vld [vmem:[#allocation3 + $0x40] sm:$0xff]
        %v1243 = vld [vmem:[#allocation3 + $0x48] sm:$0xff]
        %v1244 = vld [vmem:[#allocation3 + $0x50] sm:$0xff]
        %v1245 = vld [vmem:[#allocation3 + $0x58] sm:$0xff]
        %v1246 = vld [vmem:[#allocation3 + $0x60] sm:$0xff]
        %v1247 = vld [vmem:[#allocation3 + $0x68] sm:$0xff]
        %v1248 = vld [vmem:[#allocation3 + $0x70] sm:$0xff]
        %v1249 = vld [vmem:[#allocation3 + $0x78] sm:$0xff]
        %1251 = vset.pattern.permute.xlu0 0
        %1252 = vperm.xlu0 %1251, %v1234
        %v1253 = vpop.permute.xlu0 %1252
        %1256 = vset.pattern.permute.xlu0 0
        %1257 = vperm.xlu0 %1256, %v1235
        %v1258 = vpop.permute.xlu0 %1257
        %1261 = vset.pattern.permute.xlu0 0
        %1262 = vperm.xlu0 %1261, %v1236
        %v1263 = vpop.permute.xlu0 %1262
        %1266 = vset.pattern.permute.xlu0 0
        %1267 = vperm.xlu0 %1266, %v1237
        %v1268 = vpop.permute.xlu0 %1267
        %1271 = vset.pattern.permute.xlu0 0
        %1272 = vperm.xlu0 %1271, %v1238
        %v1273 = vpop.permute.xlu0 %1272
        %1276 = vset.pattern.permute.xlu0 0
        %1277 = vperm.xlu0 %1276, %v1239
        %v1278 = vpop.permute.xlu0 %1277
        %1281 = vset.pattern.permute.xlu0 0
        %1282 = vperm.xlu0 %1281, %v1240
        %v1283 = vpop.permute.xlu0 %1282
        %1286 = vset.pattern.permute.xlu0 0
        %1287 = vperm.xlu0 %1286, %v1241
        %v1288 = vpop.permute.xlu0 %1287
        %1291 = vset.pattern.permute.xlu0 0
        %1292 = vperm.xlu0 %1291, %v1242
        %v1293 = vpop.permute.xlu0 %1292
        %1296 = vset.pattern.permute.xlu0 0
        %1297 = vperm.xlu0 %1296, %v1243
        %v1298 = vpop.permute.xlu0 %1297
        %1301 = vset.pattern.permute.xlu0 0
        %1302 = vperm.xlu0 %1301, %v1244
        %v1303 = vpop.permute.xlu0 %1302
        %1306 = vset.pattern.permute.xlu0 0
        %1307 = vperm.xlu0 %1306, %v1245
        %v1308 = vpop.permute.xlu0 %1307
        %1311 = vset.pattern.permute.xlu0 0
        %1312 = vperm.xlu0 %1311, %v1246
        %v1313 = vpop.permute.xlu0 %1312
        %1316 = vset.pattern.permute.xlu0 0
        %1317 = vperm.xlu0 %1316, %v1247
        %v1318 = vpop.permute.xlu0 %1317
        %1321 = vset.pattern.permute.xlu0 0
        %1322 = vperm.xlu0 %1321, %v1248
        %v1323 = vpop.permute.xlu0 %1322
        %1326 = vset.pattern.permute.xlu0 0
        %1327 = vperm.xlu0 %1326, %v1249
        %v1328 = vpop.permute.xlu0 %1327
        %v1330 = vrcp.pop %v1253
        %v1331 = vmul.f32 %v1218, %v1330
        %v1332 = vrcp.pop %v1258
        %v1333 = vmul.f32 %v1219, %v1332
        %v1334 = vrcp.pop %v1263
        %v1335 = vmul.f32 %v1220, %v1334
        %v1336 = vrcp.pop %v1268
        %v1337 = vmul.f32 %v1221, %v1336
        %v1338 = vrcp.pop %v1273
        %v1339 = vmul.f32 %v1222, %v1338
        %v1340 = vrcp.pop %v1278
        %v1341 = vmul.f32 %v1223, %v1340
        %v1342 = vrcp.pop %v1283
        %v1343 = vmul.f32 %v1224, %v1342
        %v1344 = vrcp.pop %v1288
        %v1345 = vmul.f32 %v1225, %v1344
        %v1346 = vrcp.pop %v1293
        %v1347 = vmul.f32 %v1226, %v1346
        %v1348 = vrcp.pop %v1298
        %v1349 = vmul.f32 %v1227, %v1348
        %v1350 = vrcp.pop %v1303
        %v1351 = vmul.f32 %v1228, %v1350
        %v1352 = vrcp.pop %v1308
        %v1353 = vmul.f32 %v1229, %v1352
        %v1354 = vrcp.pop %v1313
        %v1355 = vmul.f32 %v1230, %v1354
        %v1356 = vrcp.pop %v1318
        %v1357 = vmul.f32 %v1231, %v1356
        %v1358 = vrcp.pop %v1323
        %v1359 = vmul.f32 %v1232, %v1358
        %v1360 = vrcp.pop %v1328
        %v1361 = vmul.f32 %v1233, %v1360
        %1362 = vst [vmem:[%s287] sm:$0xff] %v1331
        %1363 = vst [vmem:[%s287 + $0x8] sm:$0xff] %v1333
        %1364 = vst [vmem:[%s287 + $0x10] sm:$0xff] %v1335
        %1365 = vst [vmem:[%s287 + $0x18] sm:$0xff] %v1337
        %1366 = vst [vmem:[%s287 + $0x20] sm:$0xff] %v1339
        %1367 = vst [vmem:[%s287 + $0x28] sm:$0xff] %v1341
        %1368 = vst [vmem:[%s287 + $0x30] sm:$0xff] %v1343
        %1369 = vst [vmem:[%s287 + $0x38] sm:$0xff] %v1345
        %1370 = vst [vmem:[%s287 + $0x40] sm:$0xff] %v1347
        %1371 = vst [vmem:[%s287 + $0x48] sm:$0xff] %v1349
        %1372 = vst [vmem:[%s287 + $0x50] sm:$0xff] %v1351
        %1373 = vst [vmem:[%s287 + $0x58] sm:$0xff] %v1353
        %1374 = vst [vmem:[%s287 + $0x60] sm:$0xff] %v1355
        %1375 = vst [vmem:[%s287 + $0x68] sm:$0xff] %v1357
        %1376 = vst [vmem:[%s287 + $0x70] sm:$0xff] %v1359
        %1377 = vst [vmem:[%s287 + $0x78] sm:$0xff] %v1361
      $region40: #{multi_head2.8} parent=31 // pred_fallthru
        _
      %s1378 = smul.u32 16, %s20
      %p1379 = scmp.lt.s32.totalorder %s19, 7
      %s1380 = scalar_select %p1379, %s19, 7
      %p1381 = scmp.lt.s32.totalorder %s1378, 15
      %s1382 = scalar_select %p1381, %s1378, 15
      %s1383 = smul.addr %s1380, 16
      %s1384 = sadd.s32 %s1382, %s1383
      %s1385 = smul.addr %s1384, 8
      %s1386 = scalar_lea.vmem %s3, %s1385
      // Predicated region
      $region41: #{multi_head2.8} parent=31 // pred_check
        %p1387 = pneg %p137
      $region42: #{multi_head2.8} parent=31 // pred_check_branch
        %1389 = sbr.rel (%p1387) target = $region44
      $region43: #{multi_head2.8} parent=31 // pred_region
        %s1390 = smul.u32 16, %s20
      $region44: #{multi_head2.8} parent=31 // pred_fallthru
        _
    $region32: #{multi_head2.8} parent=5 // pred_fallthru
      _
    %p1391 = scmp.le.s32.totalorder 2, %s9
    // Predicated region
    $region45: #{multi_head2.8} parent=5 // pred_check
      %p1392 = pneg %p1391
    $region46: #{multi_head2.8} parent=5 // pred_check_branch
      %1394 = sbr.rel (%p1392) target = $region48
    $region47: #{multi_head2.8} parent=5 // pred_region
      %s1395 = ssub.s32 %s9, 2
      // Predicated region
      $region49: #{multi_head2.8} parent=47 // pred_check
        %p1396 = pneg %p143
      $region50: #{multi_head2.8} parent=47 // pred_check_branch
        %1398 = sbr.rel (%p1396) target = $region52
      $region51: #{multi_head2.8} parent=47 // pred_region
        %s1399 = smul.u32 16, %s23
        %p1400 = scmp.lt.s32.totalorder %s22, 7
        %s1401 = scalar_select %p1400, %s22, 7
        %p1402 = scmp.lt.s32.totalorder %s1399, 15
        %s1403 = scalar_select %p1402, %s1399, 15
        %s1404 = smul.addr %s1401, 16
        %s1405 = sadd.s32 %s1403, %s1404
        %s1406 = smul.addr %s1405, 8
        %s1407 = scalar_lea.vmem %s3, %s1406
      $region52: #{multi_head2.8} parent=47 // pred_fallthru
        _
    $region48: #{multi_head2.8} parent=5 // pred_fallthru
      _
  $region6: #{multi_head2.8} parent=0 // loop_footer
    %s13 = sadd.s32 1, %s9
  $region7: #{multi_head2.8} parent=0 // loop_footer_branch
    %8 = sbr.rel target = $region3
  $region8: #{multi_head2.8} parent=0 // loop_exit
    _

</llo_original>
